<compile_context>
chip_gen: v5e
topology: v5e:2x2
jax: 0.10.0
libtpu: 0.0.40
codegen_flags: <defaults>
</compile_context>

<pallas_src>
import math

import jax
import jax.numpy as jnp
import numpy as np
from jax import lax
from jax.experimental import pallas as pl
from jax.experimental.pallas import tpu as pltpu

EPS = 1e-5    # PyTorch BatchNorm2d default eps
LANE = 128    # TPU lane width; also matches MXU native output width


def _round_up(x, m):
    return (x + m - 1) // m * m


# ---------------------------------------------------------------------------
# In-kernel helpers (trace-time Python, fully static)
# ---------------------------------------------------------------------------
def _reflect_pad_into(pad_ref, x):
    """Write x (H2, W2, C) into pad_ref (H2+2, W2+2, C) with reflect padding of 1."""
    H2, W2 = x.shape[0], x.shape[1]
    pad_ref[1:H2 + 1, 1:W2 + 1, :] = x
    pad_ref[0:1, 1:W2 + 1, :] = x[1:2]                        # top row    = row 1
    pad_ref[H2 + 1:H2 + 2, 1:W2 + 1, :] = x[H2 - 2:H2 - 1]    # bottom row = row H2-2
    pad_ref[:, 0:1, :] = pad_ref[:, 2:3, :]                   # left col   = col 1 (corners too)
    pad_ref[:, W2 + 1:W2 + 2, :] = pad_ref[:, W2 - 1:W2, :]   # right col  = col W2-2


def _im2col_into(cols_ref, pad_ref):
    """Build (H2*W2, 9*C) im2col matrix in VMEM from the padded (H2+2, W2+2, C) map."""
    H2, W2, C = pad_ref.shape[0] - 2, pad_ref.shape[1] - 2, pad_ref.shape[2]
    t = 0
    for dh in range(3):           # static unrolled: 9 shifted views, tap-major K layout
        for dw in range(3):
            v = pad_ref[dh:dh + H2, dw:dw + W2, :]            # (H2, W2, C)
            cols_ref[:, t * C:(t + 1) * C] = v.reshape(H2 * W2, C)
            t += 1


# ---------------------------------------------------------------------------
# Fused Pallas kernel: maxpool(2) -> (conv3x3 reflect -> BN -> ReLU) x 2
# ---------------------------------------------------------------------------
def down_fused_kernel(x_ref, w1_ref, s1_ref, b1_ref, w2_ref, s2_ref, b2_ref,
                      o_ref, pad1_ref, cols1_ref, pad2_ref, cols2_ref):
    # x_ref:  (1, H, W2, 2*Cin)   NHWC input with the W 2x2-pool pairs folded onto lanes
    # w1_ref: (9*Cin,   Cmid_p)   conv1 weights (tap-major rows, lane-padded out channels)
    # w2_ref: (9*Cmid_p, Cout_p)  conv2 weights
    # s*/b*:  (1, C_p) f32        fused (conv bias + scaling_layer + BN) scale / shift
    # o_ref:  (1, H2*W2, Cout_p)  lane-dense output
    H, W2 = x_ref.shape[1], x_ref.shape[2]
    Cin = x_ref.shape[3] // 2
    H2 = H // 2
    Cmid_p = w1_ref.shape[1]

    # ---- MaxPool2d(2): row pairs live on an untiled axis, column pairs on lanes ----
    x = x_ref[0].reshape(H2, 2, W2, 2 * Cin)
    rmax = jnp.maximum(x[:, 0], x[:, 1])                          # (H2, W2, 2*Cin)
    pooled = jnp.maximum(rmax[:, :, :Cin], rmax[:, :, Cin:])      # (H2, W2, Cin)

    # ---- conv1: reflect pad + im2col in VMEM, single MXU matmul (K = 9*Cin) ----
    _reflect_pad_into(pad1_ref, pooled.astype(pad1_ref.dtype))
    _im2col_into(cols1_ref, pad1_ref)
    acc1 = jnp.dot(cols1_ref[...], w1_ref[...],
                   preferred_element_type=jnp.float32)            # (HW, Cmid_p) f32
    h1 = jnp.maximum(acc1 * s1_ref[...] + b1_ref[...], 0.0)       # fused BN + ReLU (f32)
    # padded output lanes: zero weight cols + zero scale/shift -> exactly 0 after ReLU

    # ---- conv2: same pattern on the conv1 activation (K = 9*Cmid_p) ----
    _reflect_pad_into(pad2_ref, h1.astype(pad2_ref.dtype).reshape(H2, W2, Cmid_p))
    _im2col_into(cols2_ref, pad2_ref)
    acc2 = jnp.dot(cols2_ref[...], w2_ref[...],
                   preferred_element_type=jnp.float32)            # (HW, Cout_p) f32
    y = jnp.maximum(acc2 * s2_ref[...] + b2_ref[...], 0.0)
    o_ref[0] = y.astype(o_ref.dtype)


# ---------------------------------------------------------------------------
# Wrapper
# ---------------------------------------------------------------------------
def down_forward(x_nchw, params, out_channels):
    """Down.forward: MaxPool2d(2) -> (Conv3x3 -> /s^2 -> BN -> ReLU) x 2, NCHW in/out."""
    w1, s1, b1 = params["w1"], params["scale1"], params["shift1"]
    w2, s2, b2 = params["w2"], params["scale2"], params["shift2"]
    compute_dtype = w1.dtype                      # bf16 (production) or f32 (exact check)

    N, Cin, H, W = x_nchw.shape
    H2, W2 = H // 2, W // 2
    HW = H2 * W2
    Cmid_p, Cout_p = w1.shape[1], w2.shape[1]

    # NCHW -> NHWC once, then a FREE reshape folding the 2x2-pool W pairs onto the lane axis.
    x = jnp.transpose(x_nchw, (0, 2, 3, 1)).reshape(N, H, W2, 2 * Cin)

    out = pl.pallas_call(
        down_fused_kernel,
        out_shape=jax.ShapeDtypeStruct((N, HW, Cout_p), x_nchw.dtype),
        grid=(N,),
        in_specs=[
            pl.BlockSpec((1, H, W2, 2 * Cin), lambda n: (n, 0, 0, 0)),
            # constant index_maps: weights / scale / shift stay VMEM-resident across the grid
            pl.BlockSpec((9 * Cin, Cmid_p), lambda n: (0, 0)),
            pl.BlockSpec((1, Cmid_p), lambda n: (0, 0)),
            pl.BlockSpec((1, Cmid_p), lambda n: (0, 0)),
            pl.BlockSpec((9 * Cmid_p, Cout_p), lambda n: (0, 0)),
            pl.BlockSpec((1, Cout_p), lambda n: (0, 0)),
            pl.BlockSpec((1, Cout_p), lambda n: (0, 0)),
        ],
        out_specs=pl.BlockSpec((1, HW, Cout_p), lambda n: (n, 0, 0)),
        scratch_shapes=[
            pltpu.VMEM((H2 + 2, W2 + 2, Cin), compute_dtype),       # pad1 (pooled, padded)
            pltpu.VMEM((HW, 9 * Cin), compute_dtype),               # cols1
            pltpu.VMEM((H2 + 2, W2 + 2, Cmid_p), compute_dtype),    # pad2 (conv1 act, padded)
            pltpu.VMEM((HW, 9 * Cmid_p), compute_dtype),            # cols2
        ],
        compiler_params=pltpu.CompilerParams(
            dimension_semantics=("parallel",),
            vmem_limit_bytes=64 * 1024 * 1024),   # raise default scoped VMEM limit
    )(x, w1, s1, b1, w2, s2, b2)

    # Drop the zero lane padding and go back to NCHW (pure layout glue).
    out = out.reshape(N, H2, W2, Cout_p)[..., :out_channels]
    return jnp.transpose(out, (0, 3, 1, 2))


# ---------------------------------------------------------------------------
# Deterministic PyTorch-shaped parameter init + fusion/padding for the kernel
# ---------------------------------------------------------------------------
def init_params(key, cin, cout, scaling=1):
    # TODO(synk): only scaling=1 is implemented (3x3 kernel, reflect pad=1, crop is a no-op).
    assert scaling == 1
    cmid = cout
    ks = jax.random.split(key, 8)

    def conv_init(kw, kb, ci, co):
        bound = 1.0 / math.sqrt(ci * 9)
        w = jax.random.uniform(kw, (co, ci, 3, 3), jnp.float32, -bound, bound)
        b = jax.random.uniform(kb, (co,), jnp.float32, -bound, bound)
        return w, b

    def bn_init(kg, kb, c):
        gamma = 1.0 + 0.1 * jax.random.normal(kg, (c,), jnp.float32)
        beta = 0.1 * jax.random.normal(kb, (c,), jnp.float32)
        mean = 0.05 * jnp.arange(c, dtype=jnp.float32)
        var = 1.0 + 0.02 * jnp.arange(c, dtype=jnp.float32)
        return gamma, beta, mean, var

    w1, b1 = conv_init(ks[0], ks[1], cin, cmid)
    w2, b2 = conv_init(ks[2], ks[3], cmid, cout)
    g1, be1, m1, v1 = bn_init(ks[4], ks[5], cmid)
    g2, be2, m2, v2 = bn_init(ks[6], ks[7], cout)
    return dict(w1=w1, b1=b1, g1=g1, be1=be1, m1=m1, v1=v1,
                w2=w2, b2=b2, g2=g2, be2=be2, m2=m2, v2=v2)


def prepare_kernel_params(raw, compute_dtype=jnp.bfloat16, scaling=1):
    """Fuse conv-bias + scaling_layer + BN into per-channel scale/shift, lane-pad channels,
    and lay weights out as (9*Cin_p, Cout_p) matrices (tap-major rows) for one-matmul convs."""
    s2 = float(scaling) ** 2

    def fuse(w, b, g, be, m, v, cin_pad):
        co, ci = w.shape[0], w.shape[1]
        co_p = _round_up(co, LANE)
        k = g / jnp.sqrt(v + EPS)                       # BN normalization factor
        scale = jnp.pad(k / s2, (0, co_p - co)).reshape(1, co_p)              # f32
        shift = jnp.pad((b / s2 - m) * k + be, (0, co_p - co)).reshape(1, co_p)
        # OIHW -> (kh, kw, Cin, Cout), zero-pad channels, flatten K = (kh*3+kw)*Cin_p + cin
        wt = jnp.transpose(w, (2, 3, 1, 0))
        wt = jnp.pad(wt, ((0, 0), (0, 0), (0, cin_pad - ci), (0, co_p - co)))
        return wt.reshape(9 * cin_pad, co_p).astype(compute_dtype), scale, shift

    cin = raw["w1"].shape[1]
    cmid_p = _round_up(raw["w1"].shape[0], LANE)
    w1, sc1, sh1 = fuse(raw["w1"], raw["b1"], raw["g1"], raw["be1"], raw["m1"], raw["v1"],
                        cin_pad=cin)       # conv1 K stays 9*Cin (input is not lane-padded)
    w2, sc2, sh2 = fuse(raw["w2"], raw["b2"], raw["g2"], raw["be2"], raw["m2"], raw["v2"],
                        cin_pad=cmid_p)    # conv2 consumes the lane-padded conv1 activation
    return dict(w1=w1, scale1=sc1, shift1=sh1, w2=w2, scale2=sc2, shift2=sh2)


# ---------------------------------------------------------------------------
# Pure-JAX reference (mirrors the PyTorch forward, inference-mode BN)
# ---------------------------------------------------------------------------
def reference_down(x_nchw, p):
    def block(x, w, b, g, be, m, v):
        xp = jnp.pad(x, ((0, 0), (0, 0), (1, 1), (1, 1)), mode="reflect")
        y = lax.conv_general_dilated(xp, w, (1, 1), "VALID",
                                     dimension_numbers=("NCHW", "OIHW", "NCHW"))
        y = y + b[None, :, None, None]
        y = y / 1.0  # scaling_layer, scaling=1
        y = ((y - m[None, :, None, None]) / jnp.sqrt(v + EPS)[None, :, None, None]
             * g[None, :, None, None] + be[None, :, None, None])
        return jnp.maximum(y, 0.0)

    x = lax.reduce_window(x_nchw, -jnp.inf, lax.max, (1, 1, 2, 2), (1, 1, 2, 2), "VALID")
    x = block(x, p["w1"], p["b1"], p["g1"], p["be1"], p["m1"], p["v1"])
    x = block(x, p["w2"], p["b2"], p["g2"], p["be2"], p["m2"], p["v2"])
    return x


if __name__ == "__main__":
    key = jax.random.PRNGKey(0)
    kx, kp = jax.random.split(key)

    N, Cin, H, W = 2, 4, 16, 16   # input NCHW (PyTorch convention)
    Cout = 8

    x = jax.random.normal(kx, (N, Cin, H, W), jnp.float32)
    raw = init_params(kp, Cin, Cout, scaling=1)
    ref = np.asarray(reference_down(x, raw))

    fwd = jax.jit(down_forward, static_argnames=("out_channels",))

    # f32 matmul operands: numerically faithful to the PyTorch module
    out32 = jax.block_until_ready(
        fwd(x, prepare_kernel_params(raw, jnp.float32), out_channels=Cout))
    assert out32.shape == (N, Cout, H // 2, W // 2), out32.shape
    assert np.allclose(np.asarray(out32), ref, rtol=1e-4, atol=1e-4), \
        float(np.max(np.abs(np.asarray(out32) - ref)))

    # bf16 matmul operands (f32 accumulation + epilogue): production MXU config;
    # looser tolerance only reflects bf16 operand rounding.
    outbf = jax.block_until_ready(
        fwd(x, prepare_kernel_params(raw, jnp.bfloat16), out_channels=Cout))
    assert np.allclose(np.asarray(outbf), ref, rtol=5e-2, atol=1e-1), \
        float(np.max(np.abs(np.asarray(outbf) - ref)))

    print("KERNEL_OK")
</pallas_src>

<mosaic_0001>
module attributes {stable_mosaic.version = 11 : i64} {
  func.func @down_fused_kernel(%arg0: i32, %arg1: memref<1x16x8x8xf32, #tpu.memory_space<vmem>>, %arg2: memref<36x128xf32, #tpu.memory_space<vmem>>, %arg3: memref<1x128xf32, #tpu.memory_space<vmem>>, %arg4: memref<1x128xf32, #tpu.memory_space<vmem>>, %arg5: memref<1152x128xf32, #tpu.memory_space<vmem>>, %arg6: memref<1x128xf32, #tpu.memory_space<vmem>>, %arg7: memref<1x128xf32, #tpu.memory_space<vmem>>, %arg8: memref<1x64x128xf32, #tpu.memory_space<vmem>>, %arg9: memref<10x10x4xf32, #tpu.memory_space<vmem>>, %arg10: memref<64x36xf32, #tpu.memory_space<vmem>>, %arg11: memref<10x10x128xf32, #tpu.memory_space<vmem>>, %arg12: memref<64x1152xf32, #tpu.memory_space<vmem>>) attributes {dimension_semantics = [#tpu.dimension_semantics<parallel>], iteration_bounds = array<i64: 2>, scalar_prefetch = 0 : i64, scratch_operands = 4 : i64, tpu.core_type = #tpu.core_type<tc>, window_params = [{transform_indices = @transform_0, window_bounds = array<i64: 1, 16, 8, 8>}, {pipeline_mode = #tpu.pipeline_mode<synchronous>, transform_indices = @transform_1, window_bounds = array<i64: 36, 128>}, {pipeline_mode = #tpu.pipeline_mode<synchronous>, transform_indices = @transform_2, window_bounds = array<i64: 1, 128>}, {pipeline_mode = #tpu.pipeline_mode<synchronous>, transform_indices = @transform_3, window_bounds = array<i64: 1, 128>}, {pipeline_mode = #tpu.pipeline_mode<synchronous>, transform_indices = @transform_4, window_bounds = array<i64: 1152, 128>}, {pipeline_mode = #tpu.pipeline_mode<synchronous>, transform_indices = @transform_5, window_bounds = array<i64: 1, 128>}, {pipeline_mode = #tpu.pipeline_mode<synchronous>, transform_indices = @transform_6, window_bounds = array<i64: 1, 128>}, {transform_indices = @transform_7, window_bounds = array<i64: 1, 64, 128>}]} {
    %c0 = arith.constant 0 : index
    %c0_0 = arith.constant 0 : index
    %c0_1 = arith.constant 0 : index
    %c0_2 = arith.constant 0 : index
    %0 = vector.load %arg1[%c0, %c0_0, %c0_1, %c0_2] : memref<1x16x8x8xf32, #tpu.memory_space<vmem>>, vector<1x16x8x8xf32>
    %1 = vector.shape_cast %0 : vector<1x16x8x8xf32> to vector<16x8x8xf32>
    %2 = vector.shape_cast %1 : vector<16x8x8xf32> to vector<8x2x8x8xf32>
    %3 = vector.extract_strided_slice %2 {offsets = [0, 0, 0, 0], sizes = [8, 1, 8, 8], strides = [1, 1, 1, 1]} : vector<8x2x8x8xf32> to vector<8x1x8x8xf32>
    %4 = vector.shape_cast %3 : vector<8x1x8x8xf32> to vector<8x8x8xf32>
    %5 = vector.extract_strided_slice %2 {offsets = [0, 1, 0, 0], sizes = [8, 1, 8, 8], strides = [1, 1, 1, 1]} : vector<8x2x8x8xf32> to vector<8x1x8x8xf32>
    %6 = vector.shape_cast %5 : vector<8x1x8x8xf32> to vector<8x8x8xf32>
    %7 = arith.maximumf %4, %6 : vector<8x8x8xf32>
    %8 = vector.extract_strided_slice %7 {offsets = [0, 0, 0], sizes = [8, 8, 4], strides = [1, 1, 1]} : vector<8x8x8xf32> to vector<8x8x4xf32>
    %9 = vector.extract_strided_slice %7 {offsets = [0, 0, 4], sizes = [8, 8, 4], strides = [1, 1, 1]} : vector<8x8x8xf32> to vector<8x8x4xf32>
    %10 = arith.maximumf %8, %9 : vector<8x8x4xf32>
    %c1 = arith.constant 1 : index
    %c1_3 = arith.constant 1 : index
    %c0_4 = arith.constant 0 : index
    %11 = vector.load %arg9[%c1, %c1_3, %c0_4] : memref<10x10x4xf32, #tpu.memory_space<vmem>>, vector<8x8x4xf32>
    tpu.vector_store %arg9[%c1, %c1_3, %c0_4], %10 {strides = array<i32>} : memref<10x10x4xf32, #tpu.memory_space<vmem>>, vector<8x8x4xf32>,
    %12 = vector.extract_strided_slice %10 {offsets = [1, 0, 0], sizes = [1, 8, 4], strides = [1, 1, 1]} : vector<8x8x4xf32> to vector<1x8x4xf32>
    %c0_5 = arith.constant 0 : index
    %c1_6 = arith.constant 1 : index
    %c0_7 = arith.constant 0 : index
    %13 = vector.load %arg9[%c0_5, %c1_6, %c0_7] : memref<10x10x4xf32, #tpu.memory_space<vmem>>, vector<1x8x4xf32>
    tpu.vector_store %arg9[%c0_5, %c1_6, %c0_7], %12 {strides = array<i32>} : memref<10x10x4xf32, #tpu.memory_space<vmem>>, vector<1x8x4xf32>,
    %14 = vector.extract_strided_slice %10 {offsets = [6, 0, 0], sizes = [1, 8, 4], strides = [1, 1, 1]} : vector<8x8x4xf32> to vector<1x8x4xf32>
    %c9 = arith.constant 9 : index
    %c1_8 = arith.constant 1 : index
    %c0_9 = arith.constant 0 : index
    %15 = vector.load %arg9[%c9, %c1_8, %c0_9] : memref<10x10x4xf32, #tpu.memory_space<vmem>>, vector<1x8x4xf32>
    tpu.vector_store %arg9[%c9, %c1_8, %c0_9], %14 {strides = array<i32>} : memref<10x10x4xf32, #tpu.memory_space<vmem>>, vector<1x8x4xf32>,
    %c0_10 = arith.constant 0 : index
    %c2 = arith.constant 2 : index
    %c0_11 = arith.constant 0 : index
    %16 = vector.load %arg9[%c0_10, %c2, %c0_11] : memref<10x10x4xf32, #tpu.memory_space<vmem>>, vector<10x1x4xf32>
    %c0_12 = arith.constant 0 : index
    %c0_13 = arith.constant 0 : index
    %c0_14 = arith.constant 0 : index
    %17 = vector.load %arg9[%c0_12, %c0_13, %c0_14] : memref<10x10x4xf32, #tpu.memory_space<vmem>>, vector<10x1x4xf32>
    tpu.vector_store %arg9[%c0_12, %c0_13, %c0_14], %16 {strides = array<i32>} : memref<10x10x4xf32, #tpu.memory_space<vmem>>, vector<10x1x4xf32>,
    %c0_15 = arith.constant 0 : index
    %c7 = arith.constant 7 : index
    %c0_16 = arith.constant 0 : index
    %18 = vector.load %arg9[%c0_15, %c7, %c0_16] : memref<10x10x4xf32, #tpu.memory_space<vmem>>, vector<10x1x4xf32>
    %c0_17 = arith.constant 0 : index
    %c9_18 = arith.constant 9 : index
    %c0_19 = arith.constant 0 : index
    %19 = vector.load %arg9[%c0_17, %c9_18, %c0_19] : memref<10x10x4xf32, #tpu.memory_space<vmem>>, vector<10x1x4xf32>
    tpu.vector_store %arg9[%c0_17, %c9_18, %c0_19], %18 {strides = array<i32>} : memref<10x10x4xf32, #tpu.memory_space<vmem>>, vector<10x1x4xf32>,
    %c0_20 = arith.constant 0 : index
    %c0_21 = arith.constant 0 : index
    %c0_22 = arith.constant 0 : index
    %20 = vector.load %arg9[%c0_20, %c0_21, %c0_22] : memref<10x10x4xf32, #tpu.memory_space<vmem>>, vector<8x8x4xf32>
    %21 = vector.shape_cast %20 : vector<8x8x4xf32> to vector<64x4xf32>
    %c0_23 = arith.constant 0 : index
    %c0_24 = arith.constant 0 : index
    %22 = vector.load %arg10[%c0_23, %c0_24] : memref<64x36xf32, #tpu.memory_space<vmem>>, vector<64x4xf32>
    tpu.vector_store %arg10[%c0_23, %c0_24], %21 {strides = array<i32>} : memref<64x36xf32, #tpu.memory_space<vmem>>, vector<64x4xf32>,
    %c0_25 = arith.constant 0 : index
    %c1_26 = arith.constant 1 : index
    %c0_27 = arith.constant 0 : index
    %23 = vector.load %arg9[%c0_25, %c1_26, %c0_27] : memref<10x10x4xf32, #tpu.memory_space<vmem>>, vector<8x8x4xf32>
    %24 = vector.shape_cast %23 : vector<8x8x4xf32> to vector<64x4xf32>
    %c0_28 = arith.constant 0 : index
    %c4 = arith.constant 4 : index
    %25 = vector.load %arg10[%c0_28, %c4] : memref<64x36xf32, #tpu.memory_space<vmem>>, vector<64x4xf32>
    tpu.vector_store %arg10[%c0_28, %c4], %24 {strides = array<i32>} : memref<64x36xf32, #tpu.memory_space<vmem>>, vector<64x4xf32>,
    %c0_29 = arith.constant 0 : index
    %c2_30 = arith.constant 2 : index
    %c0_31 = arith.constant 0 : index
    %26 = vector.load %arg9[%c0_29, %c2_30, %c0_31] : memref<10x10x4xf32, #tpu.memory_space<vmem>>, vector<8x8x4xf32>
    %27 = vector.shape_cast %26 : vector<8x8x4xf32> to vector<64x4xf32>
    %c0_32 = arith.constant 0 : index
    %c8 = arith.constant 8 : index
    %28 = vector.load %arg10[%c0_32, %c8] : memref<64x36xf32, #tpu.memory_space<vmem>>, vector<64x4xf32>
    tpu.vector_store %arg10[%c0_32, %c8], %27 {strides = array<i32>} : memref<64x36xf32, #tpu.memory_space<vmem>>, vector<64x4xf32>,
    %c1_33 = arith.constant 1 : index
    %c0_34 = arith.constant 0 : index
    %c0_35 = arith.constant 0 : index
    %29 = vector.load %arg9[%c1_33, %c0_34, %c0_35] : memref<10x10x4xf32, #tpu.memory_space<vmem>>, vector<8x8x4xf32>
    %30 = vector.shape_cast %29 : vector<8x8x4xf32> to vector<64x4xf32>
    %c0_36 = arith.constant 0 : index
    %c12 = arith.constant 12 : index
    %31 = vector.load %arg10[%c0_36, %c12] : memref<64x36xf32, #tpu.memory_space<vmem>>, vector<64x4xf32>
    tpu.vector_store %arg10[%c0_36, %c12], %30 {strides = array<i32>} : memref<64x36xf32, #tpu.memory_space<vmem>>, vector<64x4xf32>,
    %c1_37 = arith.constant 1 : index
    %c1_38 = arith.constant 1 : index
    %c0_39 = arith.constant 0 : index
    %32 = vector.load %arg9[%c1_37, %c1_38, %c0_39] : memref<10x10x4xf32, #tpu.memory_space<vmem>>, vector<8x8x4xf32>
    %33 = vector.shape_cast %32 : vector<8x8x4xf32> to vector<64x4xf32>
    %c0_40 = arith.constant 0 : index
    %c16 = arith.constant 16 : index
    %34 = vector.load %arg10[%c0_40, %c16] : memref<64x36xf32, #tpu.memory_space<vmem>>, vector<64x4xf32>
    tpu.vector_store %arg10[%c0_40, %c16], %33 {strides = array<i32>} : memref<64x36xf32, #tpu.memory_space<vmem>>, vector<64x4xf32>,
    %c1_41 = arith.constant 1 : index
    %c2_42 = arith.constant 2 : index
    %c0_43 = arith.constant 0 : index
    %35 = vector.load %arg9[%c1_41, %c2_42, %c0_43] : memref<10x10x4xf32, #tpu.memory_space<vmem>>, vector<8x8x4xf32>
    %36 = vector.shape_cast %35 : vector<8x8x4xf32> to vector<64x4xf32>
    %c0_44 = arith.constant 0 : index
    %c20 = arith.constant 20 : index
    %37 = vector.load %arg10[%c0_44, %c20] : memref<64x36xf32, #tpu.memory_space<vmem>>, vector<64x4xf32>
    tpu.vector_store %arg10[%c0_44, %c20], %36 {strides = array<i32>} : memref<64x36xf32, #tpu.memory_space<vmem>>, vector<64x4xf32>,
    %c2_45 = arith.constant 2 : index
    %c0_46 = arith.constant 0 : index
    %c0_47 = arith.constant 0 : index
    %38 = vector.load %arg9[%c2_45, %c0_46, %c0_47] : memref<10x10x4xf32, #tpu.memory_space<vmem>>, vector<8x8x4xf32>
    %39 = vector.shape_cast %38 : vector<8x8x4xf32> to vector<64x4xf32>
    %c0_48 = arith.constant 0 : index
    %c24 = arith.constant 24 : index
    %40 = vector.load %arg10[%c0_48, %c24] : memref<64x36xf32, #tpu.memory_space<vmem>>, vector<64x4xf32>
    tpu.vector_store %arg10[%c0_48, %c24], %39 {strides = array<i32>} : memref<64x36xf32, #tpu.memory_space<vmem>>, vector<64x4xf32>,
    %c2_49 = arith.constant 2 : index
    %c1_50 = arith.constant 1 : index
    %c0_51 = arith.constant 0 : index
    %41 = vector.load %arg9[%c2_49, %c1_50, %c0_51] : memref<10x10x4xf32, #tpu.memory_space<vmem>>, vector<8x8x4xf32>
    %42 = vector.shape_cast %41 : vector<8x8x4xf32> to vector<64x4xf32>
    %c0_52 = arith.constant 0 : index
    %c28 = arith.constant 28 : index
    %43 = vector.load %arg10[%c0_52, %c28] : memref<64x36xf32, #tpu.memory_space<vmem>>, vector<64x4xf32>
    tpu.vector_store %arg10[%c0_52, %c28], %42 {strides = array<i32>} : memref<64x36xf32, #tpu.memory_space<vmem>>, vector<64x4xf32>,
    %c2_53 = arith.constant 2 : index
    %c2_54 = arith.constant 2 : index
    %c0_55 = arith.constant 0 : index
    %44 = vector.load %arg9[%c2_53, %c2_54, %c0_55] : memref<10x10x4xf32, #tpu.memory_space<vmem>>, vector<8x8x4xf32>
    %45 = vector.shape_cast %44 : vector<8x8x4xf32> to vector<64x4xf32>
    %c0_56 = arith.constant 0 : index
    %c32 = arith.constant 32 : index
    %46 = vector.load %arg10[%c0_56, %c32] : memref<64x36xf32, #tpu.memory_space<vmem>>, vector<64x4xf32>
    tpu.vector_store %arg10[%c0_56, %c32], %45 {strides = array<i32>} : memref<64x36xf32, #tpu.memory_space<vmem>>, vector<64x4xf32>,
    %c0_57 = arith.constant 0 : index
    %c0_58 = arith.constant 0 : index
    %47 = vector.load %arg10[%c0_57, %c0_58] : memref<64x36xf32, #tpu.memory_space<vmem>>, vector<64x36xf32>
    %c0_59 = arith.constant 0 : index
    %c0_60 = arith.constant 0 : index
    %48 = vector.load %arg2[%c0_59, %c0_60] : memref<36x128xf32, #tpu.memory_space<vmem>>, vector<36x128xf32>
    %cst = arith.constant dense<0.000000e+00> : vector<64x128xf32>
    %49 = tpu.matmul %47, %48, %cst {dimension_numbers = #tpu.dot_dimension_numbers<[1], [0], [0], [1], [0, 0, 1, 1], [], []>} : vector<64x36xf32>, vector<36x128xf32>, vector<64x128xf32> -> vector<64x128xf32>
    %c0_61 = arith.constant 0 : index
    %c0_62 = arith.constant 0 : index
    %50 = vector.load %arg3[%c0_61, %c0_62] : memref<1x128xf32, #tpu.memory_space<vmem>>, vector<1x128xf32>
    %51 = vector.broadcast %50 : vector<1x128xf32> to vector<64x128xf32>
    %52 = arith.mulf %49, %51 : vector<64x128xf32>
    %c0_63 = arith.constant 0 : index
    %c0_64 = arith.constant 0 : index
    %53 = vector.load %arg4[%c0_63, %c0_64] : memref<1x128xf32, #tpu.memory_space<vmem>>, vector<1x128xf32>
    %54 = vector.broadcast %53 : vector<1x128xf32> to vector<64x128xf32>
    %55 = arith.addf %52, %54 : vector<64x128xf32>
    %cst_65 = arith.constant 0.000000e+00 : f32
    %56 = vector.broadcast %cst_65 : f32 to vector<64x128xf32>
    %57 = arith.maximumf %55, %56 : vector<64x128xf32>
    %58 = vector.shape_cast %57 : vector<64x128xf32> to vector<8x8x128xf32>
    %c1_66 = arith.constant 1 : index
    %c1_67 = arith.constant 1 : index
    %c0_68 = arith.constant 0 : index
    %59 = vector.load %arg11[%c1_66, %c1_67, %c0_68] : memref<10x10x128xf32, #tpu.memory_space<vmem>>, vector<8x8x128xf32>
    tpu.vector_store %arg11[%c1_66, %c1_67, %c0_68], %58 {strides = array<i32>} : memref<10x10x128xf32, #tpu.memory_space<vmem>>, vector<8x8x128xf32>,
    %60 = vector.extract_strided_slice %58 {offsets = [1, 0, 0], sizes = [1, 8, 128], strides = [1, 1, 1]} : vector<8x8x128xf32> to vector<1x8x128xf32>
    %c0_69 = arith.constant 0 : index
    %c1_70 = arith.constant 1 : index
    %c0_71 = arith.constant 0 : index
    %61 = vector.load %arg11[%c0_69, %c1_70, %c0_71] : memref<10x10x128xf32, #tpu.memory_space<vmem>>, vector<1x8x128xf32>
    tpu.vector_store %arg11[%c0_69, %c1_70, %c0_71], %60 {strides = array<i32>} : memref<10x10x128xf32, #tpu.memory_space<vmem>>, vector<1x8x128xf32>,
    %62 = vector.extract_strided_slice %58 {offsets = [6, 0, 0], sizes = [1, 8, 128], strides = [1, 1, 1]} : vector<8x8x128xf32> to vector<1x8x128xf32>
    %c9_72 = arith.constant 9 : index
    %c1_73 = arith.constant 1 : index
    %c0_74 = arith.constant 0 : index
    %63 = vector.load %arg11[%c9_72, %c1_73, %c0_74] : memref<10x10x128xf32, #tpu.memory_space<vmem>>, vector<1x8x128xf32>
    tpu.vector_store %arg11[%c9_72, %c1_73, %c0_74], %62 {strides = array<i32>} : memref<10x10x128xf32, #tpu.memory_space<vmem>>, vector<1x8x128xf32>,
    %c0_75 = arith.constant 0 : index
    %c2_76 = arith.constant 2 : index
    %c0_77 = arith.constant 0 : index
    %64 = vector.load %arg11[%c0_75, %c2_76, %c0_77] : memref<10x10x128xf32, #tpu.memory_space<vmem>>, vector<10x1x128xf32>
    %c0_78 = arith.constant 0 : index
    %c0_79 = arith.constant 0 : index
    %c0_80 = arith.constant 0 : index
    %65 = vector.load %arg11[%c0_78, %c0_79, %c0_80] : memref<10x10x128xf32, #tpu.memory_space<vmem>>, vector<10x1x128xf32>
    tpu.vector_store %arg11[%c0_78, %c0_79, %c0_80], %64 {strides = array<i32>} : memref<10x10x128xf32, #tpu.memory_space<vmem>>, vector<10x1x128xf32>,
    %c0_81 = arith.constant 0 : index
    %c7_82 = arith.constant 7 : index
    %c0_83 = arith.constant 0 : index
    %66 = vector.load %arg11[%c0_81, %c7_82, %c0_83] : memref<10x10x128xf32, #tpu.memory_space<vmem>>, vector<10x1x128xf32>
    %c0_84 = arith.constant 0 : index
    %c9_85 = arith.constant 9 : index
    %c0_86 = arith.constant 0 : index
    %67 = vector.load %arg11[%c0_84, %c9_85, %c0_86] : memref<10x10x128xf32, #tpu.memory_space<vmem>>, vector<10x1x128xf32>
    tpu.vector_store %arg11[%c0_84, %c9_85, %c0_86], %66 {strides = array<i32>} : memref<10x10x128xf32, #tpu.memory_space<vmem>>, vector<10x1x128xf32>,
    %c0_87 = arith.constant 0 : index
    %c0_88 = arith.constant 0 : index
    %c0_89 = arith.constant 0 : index
    %68 = vector.load %arg11[%c0_87, %c0_88, %c0_89] : memref<10x10x128xf32, #tpu.memory_space<vmem>>, vector<8x8x128xf32>
    %69 = vector.shape_cast %68 : vector<8x8x128xf32> to vector<64x128xf32>
    %c0_90 = arith.constant 0 : index
    %c0_91 = arith.constant 0 : index
    %70 = vector.load %arg12[%c0_90, %c0_91] : memref<64x1152xf32, #tpu.memory_space<vmem>>, vector<64x128xf32>
    tpu.vector_store %arg12[%c0_90, %c0_91], %69 {strides = array<i32>} : memref<64x1152xf32, #tpu.memory_space<vmem>>, vector<64x128xf32>,
    %c0_92 = arith.constant 0 : index
    %c1_93 = arith.constant 1 : index
    %c0_94 = arith.constant 0 : index
    %71 = vector.load %arg11[%c0_92, %c1_93, %c0_94] : memref<10x10x128xf32, #tpu.memory_space<vmem>>, vector<8x8x128xf32>
    %72 = vector.shape_cast %71 : vector<8x8x128xf32> to vector<64x128xf32>
    %c0_95 = arith.constant 0 : index
    %c128 = arith.constant 128 : index
    %73 = vector.load %arg12[%c0_95, %c128] : memref<64x1152xf32, #tpu.memory_space<vmem>>, vector<64x128xf32>
    tpu.vector_store %arg12[%c0_95, %c128], %72 {strides = array<i32>} : memref<64x1152xf32, #tpu.memory_space<vmem>>, vector<64x128xf32>,
    %c0_96 = arith.constant 0 : index
    %c2_97 = arith.constant 2 : index
    %c0_98 = arith.constant 0 : index
    %74 = vector.load %arg11[%c0_96, %c2_97, %c0_98] : memref<10x10x128xf32, #tpu.memory_space<vmem>>, vector<8x8x128xf32>
    %75 = vector.shape_cast %74 : vector<8x8x128xf32> to vector<64x128xf32>
    %c0_99 = arith.constant 0 : index
    %c256 = arith.constant 256 : index
    %76 = vector.load %arg12[%c0_99, %c256] : memref<64x1152xf32, #tpu.memory_space<vmem>>, vector<64x128xf32>
    tpu.vector_store %arg12[%c0_99, %c256], %75 {strides = array<i32>} : memref<64x1152xf32, #tpu.memory_space<vmem>>, vector<64x128xf32>,
    %c1_100 = arith.constant 1 : index
    %c0_101 = arith.constant 0 : index
    %c0_102 = arith.constant 0 : index
    %77 = vector.load %arg11[%c1_100, %c0_101, %c0_102] : memref<10x10x128xf32, #tpu.memory_space<vmem>>, vector<8x8x128xf32>
    %78 = vector.shape_cast %77 : vector<8x8x128xf32> to vector<64x128xf32>
    %c0_103 = arith.constant 0 : index
    %c384 = arith.constant 384 : index
    %79 = vector.load %arg12[%c0_103, %c384] : memref<64x1152xf32, #tpu.memory_space<vmem>>, vector<64x128xf32>
    tpu.vector_store %arg12[%c0_103, %c384], %78 {strides = array<i32>} : memref<64x1152xf32, #tpu.memory_space<vmem>>, vector<64x128xf32>,
    %c1_104 = arith.constant 1 : index
    %c1_105 = arith.constant 1 : index
    %c0_106 = arith.constant 0 : index
    %80 = vector.load %arg11[%c1_104, %c1_105, %c0_106] : memref<10x10x128xf32, #tpu.memory_space<vmem>>, vector<8x8x128xf32>
    %81 = vector.shape_cast %80 : vector<8x8x128xf32> to vector<64x128xf32>
    %c0_107 = arith.constant 0 : index
    %c512 = arith.constant 512 : index
    %82 = vector.load %arg12[%c0_107, %c512] : memref<64x1152xf32, #tpu.memory_space<vmem>>, vector<64x128xf32>
    tpu.vector_store %arg12[%c0_107, %c512], %81 {strides = array<i32>} : memref<64x1152xf32, #tpu.memory_space<vmem>>, vector<64x128xf32>,
    %c1_108 = arith.constant 1 : index
    %c2_109 = arith.constant 2 : index
    %c0_110 = arith.constant 0 : index
    %83 = vector.load %arg11[%c1_108, %c2_109, %c0_110] : memref<10x10x128xf32, #tpu.memory_space<vmem>>, vector<8x8x128xf32>
    %84 = vector.shape_cast %83 : vector<8x8x128xf32> to vector<64x128xf32>
    %c0_111 = arith.constant 0 : index
    %c640 = arith.constant 640 : index
    %85 = vector.load %arg12[%c0_111, %c640] : memref<64x1152xf32, #tpu.memory_space<vmem>>, vector<64x128xf32>
    tpu.vector_store %arg12[%c0_111, %c640], %84 {strides = array<i32>} : memref<64x1152xf32, #tpu.memory_space<vmem>>, vector<64x128xf32>,
    %c2_112 = arith.constant 2 : index
    %c0_113 = arith.constant 0 : index
    %c0_114 = arith.constant 0 : index
    %86 = vector.load %arg11[%c2_112, %c0_113, %c0_114] : memref<10x10x128xf32, #tpu.memory_space<vmem>>, vector<8x8x128xf32>
    %87 = vector.shape_cast %86 : vector<8x8x128xf32> to vector<64x128xf32>
    %c0_115 = arith.constant 0 : index
    %c768 = arith.constant 768 : index
    %88 = vector.load %arg12[%c0_115, %c768] : memref<64x1152xf32, #tpu.memory_space<vmem>>, vector<64x128xf32>
    tpu.vector_store %arg12[%c0_115, %c768], %87 {strides = array<i32>} : memref<64x1152xf32, #tpu.memory_space<vmem>>, vector<64x128xf32>,
    %c2_116 = arith.constant 2 : index
    %c1_117 = arith.constant 1 : index
    %c0_118 = arith.constant 0 : index
    %89 = vector.load %arg11[%c2_116, %c1_117, %c0_118] : memref<10x10x128xf32, #tpu.memory_space<vmem>>, vector<8x8x128xf32>
    %90 = vector.shape_cast %89 : vector<8x8x128xf32> to vector<64x128xf32>
    %c0_119 = arith.constant 0 : index
    %c896 = arith.constant 896 : index
    %91 = vector.load %arg12[%c0_119, %c896] : memref<64x1152xf32, #tpu.memory_space<vmem>>, vector<64x128xf32>
    tpu.vector_store %arg12[%c0_119, %c896], %90 {strides = array<i32>} : memref<64x1152xf32, #tpu.memory_space<vmem>>, vector<64x128xf32>,
    %c2_120 = arith.constant 2 : index
    %c2_121 = arith.constant 2 : index
    %c0_122 = arith.constant 0 : index
    %92 = vector.load %arg11[%c2_120, %c2_121, %c0_122] : memref<10x10x128xf32, #tpu.memory_space<vmem>>, vector<8x8x128xf32>
    %93 = vector.shape_cast %92 : vector<8x8x128xf32> to vector<64x128xf32>
    %c0_123 = arith.constant 0 : index
    %c1024 = arith.constant 1024 : index
    %94 = vector.load %arg12[%c0_123, %c1024] : memref<64x1152xf32, #tpu.memory_space<vmem>>, vector<64x128xf32>
    tpu.vector_store %arg12[%c0_123, %c1024], %93 {strides = array<i32>} : memref<64x1152xf32, #tpu.memory_space<vmem>>, vector<64x128xf32>,
    %c0_124 = arith.constant 0 : index
    %c0_125 = arith.constant 0 : index
    %95 = vector.load %arg12[%c0_124, %c0_125] : memref<64x1152xf32, #tpu.memory_space<vmem>>, vector<64x1152xf32>
    %c0_126 = arith.constant 0 : index
    %c0_127 = arith.constant 0 : index
    %96 = vector.load %arg5[%c0_126, %c0_127] : memref<1152x128xf32, #tpu.memory_space<vmem>>, vector<1152x128xf32>
    %cst_128 = arith.constant dense<0.000000e+00> : vector<64x128xf32>
    %97 = tpu.matmul %95, %96, %cst_128 {dimension_numbers = #tpu.dot_dimension_numbers<[1], [0], [0], [1], [0, 0, 1, 1], [], []>} : vector<64x1152xf32>, vector<1152x128xf32>, vector<64x128xf32> -> vector<64x128xf32>
    %c0_129 = arith.constant 0 : index
    %c0_130 = arith.constant 0 : index
    %98 = vector.load %arg6[%c0_129, %c0_130] : memref<1x128xf32, #tpu.memory_space<vmem>>, vector<1x128xf32>
    %99 = vector.broadcast %98 : vector<1x128xf32> to vector<64x128xf32>
    %100 = arith.mulf %97, %99 : vector<64x128xf32>
    %c0_131 = arith.constant 0 : index
    %c0_132 = arith.constant 0 : index
    %101 = vector.load %arg7[%c0_131, %c0_132] : memref<1x128xf32, #tpu.memory_space<vmem>>, vector<1x128xf32>
    %102 = vector.broadcast %101 : vector<1x128xf32> to vector<64x128xf32>
    %103 = arith.addf %100, %102 : vector<64x128xf32>
    %cst_133 = arith.constant 0.000000e+00 : f32
    %104 = vector.broadcast %cst_133 : f32 to vector<64x128xf32>
    %105 = arith.maximumf %103, %104 : vector<64x128xf32>
    %c0_134 = arith.constant 0 : index
    %c0_135 = arith.constant 0 : index
    %c0_136 = arith.constant 0 : index
    %106 = vector.load %arg8[%c0_134, %c0_135, %c0_136] : memref<1x64x128xf32, #tpu.memory_space<vmem>>, vector<1x64x128xf32>
    %107 = vector.shape_cast %106 : vector<1x64x128xf32> to vector<64x128xf32>
    %108 = vector.shape_cast %105 : vector<64x128xf32> to vector<1x64x128xf32>
    tpu.vector_store %arg8[%c0_134, %c0_135, %c0_136], %108 {strides = array<i32>} : memref<1x64x128xf32, #tpu.memory_space<vmem>>, vector<1x64x128xf32>,
    return
  }
  func.func @transform_0(%arg0: i32) -> (i32, i32, i32, i32) {
    %c0_i32 = arith.constant 0 : i32
    %c0_i32_0 = arith.constant 0 : i32
    %c0_i32_1 = arith.constant 0 : i32
    %c0_i32_2 = arith.constant 0 : i32
    return %arg0, %c0_i32, %c0_i32_0, %c0_i32_1 : i32, i32, i32, i32
  }
  func.func @transform_1(%arg0: i32) -> (i32, i32) {
    %c0_i32 = arith.constant 0 : i32
    %c0_i32_0 = arith.constant 0 : i32
    %c0_i32_1 = arith.constant 0 : i32
    return %c0_i32, %c0_i32_0 : i32, i32
  }
  func.func @transform_2(%arg0: i32) -> (i32, i32) {
    %c0_i32 = arith.constant 0 : i32
    %c0_i32_0 = arith.constant 0 : i32
    %c0_i32_1 = arith.constant 0 : i32
    return %c0_i32, %c0_i32_0 : i32, i32
  }
  func.func @transform_3(%arg0: i32) -> (i32, i32) {
    %c0_i32 = arith.constant 0 : i32
    %c0_i32_0 = arith.constant 0 : i32
    %c0_i32_1 = arith.constant 0 : i32
    return %c0_i32, %c0_i32_0 : i32, i32
  }
  func.func @transform_4(%arg0: i32) -> (i32, i32) {
    %c0_i32 = arith.constant 0 : i32
    %c0_i32_0 = arith.constant 0 : i32
    %c0_i32_1 = arith.constant 0 : i32
    return %c0_i32, %c0_i32_0 : i32, i32
  }
  func.func @transform_5(%arg0: i32) -> (i32, i32) {
    %c0_i32 = arith.constant 0 : i32
    %c0_i32_0 = arith.constant 0 : i32
    %c0_i32_1 = arith.constant 0 : i32
    return %c0_i32, %c0_i32_0 : i32, i32
  }
  func.func @transform_6(%arg0: i32) -> (i32, i32) {
    %c0_i32 = arith.constant 0 : i32
    %c0_i32_0 = arith.constant 0 : i32
    %c0_i32_1 = arith.constant 0 : i32
    return %c0_i32, %c0_i32_0 : i32, i32
  }
  func.func @transform_7(%arg0: i32) -> (i32, i32, i32) {
    %c0_i32 = arith.constant 0 : i32
    %c0_i32_0 = arith.constant 0 : i32
    %c0_i32_1 = arith.constant 0 : i32
    return %arg0, %c0_i32, %c0_i32_0 : i32, i32, i32
  }
}

</mosaic_0001>

<llo_original>
// kernel: down_forward.1
$region0: #{down_forward.1}
  #allocation0 [shape = 'u32[]', space=smem, size = 0x4, offset = 0x4, fixed_abs, tag = 'smem constant byte address 0x4 - core index']
  #allocation1 [shape = 'u32[72,128]{1,0:T(1,128)}', space=vmem, size = 0x9000, scoped, tag = 'internal scratch']
  #allocation2 [shape = 'f32[10,10,4]{2,1,0:T(8,128)}', space=vmem, size = 0x14000, scoped, tag = 'scratch operand']
  #allocation3 [shape = 'f32[64,36]{1,0:T(8,128)}', space=vmem, size = 0x8000, scoped, tag = 'scratch operand']
  #allocation4 [shape = 'f32[10,10,128]{2,1,0:T(8,128)}', space=vmem, size = 0x14000, scoped, tag = 'scratch operand']
  #allocation5 [shape = 'f32[64,1152]{1,0:T(8,128)}', space=vmem, size = 0x48000, scoped, tag = 'scratch operand']
  %s0 = inlined_call_operand.vmem [shape: f32[2,16,8,8], index: 0, kind: input, shape index: {}]
  %s1 = inlined_call_operand.vmem [shape: f32[36,128], index: 1, kind: input, shape index: {}]
  %s2 = inlined_call_operand.vmem [shape: f32[1,128], index: 2, kind: input, shape index: {}]
  %s3 = inlined_call_operand.vmem [shape: f32[1,128], index: 3, kind: input, shape index: {}]
  %s4 = inlined_call_operand.hbm [shape: f32[1152,128], index: 4, kind: input, shape index: {}]
  %s5 = inlined_call_operand.vmem [shape: f32[1,128], index: 5, kind: input, shape index: {}]
  %s6 = inlined_call_operand.vmem [shape: f32[1,128], index: 6, kind: input, shape index: {}]
  %s7 = inlined_call_operand.vmem [shape: f32[2,64,128], index: 7, kind: output, shape index: {}]
  %s8 = sld [smem:[#allocation0]]
  $region65: #{down_forward.1} parent=0
    _
  %s10 = ssub.s32 1, %s8
  %s11 = scalar_select 0, %s10, %s8
  $region1: #{down_forward.1} parent=0
    #allocation6 [shape = 'u8[589824]{0}', space=vmem, size = 0x90000, scoped, tag = 'input window, operand 4, single buffered']
    #allocation7 [shape = 's32[2]{0}', space=sflag, size = 0x8, scoped, tag = 'scoped memory for down_forward.1']
    %12 = vsyncpa [#allocation7], 0
    loop: start=0, step=1, limit=4
    $region2: #{down_forward.1} parent=1 // loop_pre_header
      _
    $region3: #{down_forward.1} parent=1 // loop_header
      %s14 = sphi 0, %s18
      %p15 = scmp.ge.s32.totalorder %s14, 4
      %s24 = sphi 0, %s26
      %s27 = sphi 0, %s24
      %s28 = sphi 0, %s27
      %s44 = sphi 0, %s28
      %s48 = sphi 0, %s48
      %s50 = sphi 0, %s48
      %s51 = sphi 0, %s50
      %s65 = sphi 0, %s51
      %s69 = sphi 0, %s69
      %s71 = sphi 0, %s69
      %s72 = sphi 0, %s71
      %s86 = sphi 0, %s72
      %s90 = sphi 0, %s90
      %s92 = sphi 0, %s90
      %s93 = sphi 0, %s92
      %s107 = sphi 0, %s93
      %s111 = sphi 0, %s111
      %s113 = sphi 0, %s111
      %s114 = sphi 0, %s113
      %s128 = sphi 0, %s114
      %s132 = sphi 0, %s132
      %s134 = sphi 0, %s132
      %s135 = sphi 0, %s134
      %s149 = sphi 0, %s135
      %s153 = sphi 0, %s153
      %s155 = sphi 0, %s153
      %s156 = sphi 0, %s155
      %s170 = sphi 0, %s156
      %s176 = sphi 0, %s178
      %s179 = sphi 0, %s176
      %s180 = sphi 0, %s179
      %s196 = sphi 0, %s180
    $region4: #{down_forward.1} parent=1 // loop_header_branch
      %17 = sbr.rel (%p15) target = $region8
    $region5: #{down_forward.1} parent=1 // loop_body
      %s19 = ssub.s32 %s14, 1
      %s20 = ssub.s32 %s14, 2
      %s21 = sadd.s32 %s14, 1
      %s22 = ssub.s32 %s14, %s21
      %p23 = scmp.eq.s32.totalorder %s22, 0
      %s25 = sadd.s32 %s24, 1
      %s26 = scalar_select %p23, %s24, %s25
      %p29 = pneg %p23
      %p30 = scmp.eq.s32.totalorder %s14, 1
      %p31 = por %p29, %p30
      %p32 = scmp.ne.s32.totalorder %s24, %s27
      %p33 = scmp.eq.s32.totalorder %s14, 0
      %p34 = por %p32, %p33
      %p35 = scmp.ne.s32.totalorder %s24, %s27
      %p36 = scmp.eq.s32.totalorder %s19, 1
      %p37 = por %p35, %p36
      %p38 = scmp.ne.s32.totalorder %s27, %s28
      %p39 = scmp.eq.s32.totalorder %s19, 0
      %p40 = por %p38, %p39
      %p41 = scmp.ne.s32.totalorder %s27, %s28
      %p42 = scmp.eq.s32.totalorder %s20, 1
      %p43 = por %p41, %p42
      %p45 = scmp.ne.s32.totalorder %s28, %s44
      %p46 = scmp.eq.s32.totalorder %s20, 0
      %p47 = por %p45, %p46
      %s49 = sadd.s32 %s48, 1
      %p52 = scmp.eq.s32.totalorder %s14, 1
      %p53 = scmp.ne.s32.totalorder %s48, %s50
      %p54 = scmp.eq.s32.totalorder %s14, 0
      %p55 = por %p53, %p54
      %p56 = scmp.ne.s32.totalorder %s48, %s50
      %p57 = scmp.eq.s32.totalorder %s19, 1
      %p58 = por %p56, %p57
      %p59 = scmp.ne.s32.totalorder %s50, %s51
      %p60 = scmp.eq.s32.totalorder %s19, 0
      %p61 = por %p59, %p60
      %p62 = scmp.ne.s32.totalorder %s50, %s51
      %p63 = scmp.eq.s32.totalorder %s20, 1
      %p64 = por %p62, %p63
      %p66 = scmp.ne.s32.totalorder %s51, %s65
      %p67 = scmp.eq.s32.totalorder %s20, 0
      %p68 = por %p66, %p67
      %s70 = sadd.s32 %s69, 1
      %p73 = scmp.eq.s32.totalorder %s14, 1
      %p74 = scmp.ne.s32.totalorder %s69, %s71
      %p75 = scmp.eq.s32.totalorder %s14, 0
      %p76 = por %p74, %p75
      %p77 = scmp.ne.s32.totalorder %s69, %s71
      %p78 = scmp.eq.s32.totalorder %s19, 1
      %p79 = por %p77, %p78
      %p80 = scmp.ne.s32.totalorder %s71, %s72
      %p81 = scmp.eq.s32.totalorder %s19, 0
      %p82 = por %p80, %p81
      %p83 = scmp.ne.s32.totalorder %s71, %s72
      %p84 = scmp.eq.s32.totalorder %s20, 1
      %p85 = por %p83, %p84
      %p87 = scmp.ne.s32.totalorder %s72, %s86
      %p88 = scmp.eq.s32.totalorder %s20, 0
      %p89 = por %p87, %p88
      %s91 = sadd.s32 %s90, 1
      %p94 = scmp.eq.s32.totalorder %s14, 1
      %p95 = scmp.ne.s32.totalorder %s90, %s92
      %p96 = scmp.eq.s32.totalorder %s14, 0
      %p97 = por %p95, %p96
      %p98 = scmp.ne.s32.totalorder %s90, %s92
      %p99 = scmp.eq.s32.totalorder %s19, 1
      %p100 = por %p98, %p99
      %p101 = scmp.ne.s32.totalorder %s92, %s93
      %p102 = scmp.eq.s32.totalorder %s19, 0
      %p103 = por %p101, %p102
      %p104 = scmp.ne.s32.totalorder %s92, %s93
      %p105 = scmp.eq.s32.totalorder %s20, 1
      %p106 = por %p104, %p105
      %p108 = scmp.ne.s32.totalorder %s93, %s107
      %p109 = scmp.eq.s32.totalorder %s20, 0
      %p110 = por %p108, %p109
      %s112 = sadd.s32 %s111, 1
      %p115 = scmp.eq.s32.totalorder %s14, 1
      %p116 = scmp.ne.s32.totalorder %s111, %s113
      %p117 = scmp.eq.s32.totalorder %s14, 0
      %p118 = por %p116, %p117
      %p119 = scmp.ne.s32.totalorder %s111, %s113
      %p120 = scmp.eq.s32.totalorder %s19, 1
      %p121 = por %p119, %p120
      %p122 = scmp.ne.s32.totalorder %s113, %s114
      %p123 = scmp.eq.s32.totalorder %s19, 0
      %p124 = por %p122, %p123
      %p125 = scmp.ne.s32.totalorder %s113, %s114
      %p126 = scmp.eq.s32.totalorder %s20, 1
      %p127 = por %p125, %p126
      %p129 = scmp.ne.s32.totalorder %s114, %s128
      %p130 = scmp.eq.s32.totalorder %s20, 0
      %p131 = por %p129, %p130
      %s133 = sadd.s32 %s132, 1
      %p136 = scmp.eq.s32.totalorder %s14, 1
      %p137 = scmp.ne.s32.totalorder %s132, %s134
      %p138 = scmp.eq.s32.totalorder %s14, 0
      %p139 = por %p137, %p138
      %p140 = scmp.ne.s32.totalorder %s132, %s134
      %p141 = scmp.eq.s32.totalorder %s19, 1
      %p142 = por %p140, %p141
      %p143 = scmp.ne.s32.totalorder %s134, %s135
      %p144 = scmp.eq.s32.totalorder %s19, 0
      %p145 = por %p143, %p144
      %p146 = scmp.ne.s32.totalorder %s134, %s135
      %p147 = scmp.eq.s32.totalorder %s20, 1
      %p148 = por %p146, %p147
      %p150 = scmp.ne.s32.totalorder %s135, %s149
      %p151 = scmp.eq.s32.totalorder %s20, 0
      %p152 = por %p150, %p151
      %s154 = sadd.s32 %s153, 1
      %p157 = scmp.eq.s32.totalorder %s14, 1
      %p158 = scmp.ne.s32.totalorder %s153, %s155
      %p159 = scmp.eq.s32.totalorder %s14, 0
      %p160 = por %p158, %p159
      %p161 = scmp.ne.s32.totalorder %s153, %s155
      %p162 = scmp.eq.s32.totalorder %s19, 1
      %p163 = por %p161, %p162
      %p164 = scmp.ne.s32.totalorder %s155, %s156
      %p165 = scmp.eq.s32.totalorder %s19, 0
      %p166 = por %p164, %p165
      %p167 = scmp.ne.s32.totalorder %s155, %s156
      %p168 = scmp.eq.s32.totalorder %s20, 1
      %p169 = por %p167, %p168
      %p171 = scmp.ne.s32.totalorder %s156, %s170
      %p172 = scmp.eq.s32.totalorder %s20, 0
      %p173 = por %p171, %p172
      %s174 = ssub.s32 %s14, %s21
      %p175 = scmp.eq.s32.totalorder %s174, 0
      %s177 = sadd.s32 %s176, 1
      %s178 = scalar_select %p175, %s176, %s177
      %p181 = pneg %p175
      %p182 = scmp.eq.s32.totalorder %s14, 1
      %p183 = por %p181, %p182
      %p184 = scmp.ne.s32.totalorder %s176, %s179
      %p185 = scmp.eq.s32.totalorder %s14, 0
      %p186 = por %p184, %p185
      %p187 = scmp.ne.s32.totalorder %s176, %s179
      %p188 = scmp.eq.s32.totalorder %s19, 1
      %p189 = por %p187, %p188
      %p190 = scmp.ne.s32.totalorder %s179, %s180
      %p191 = scmp.eq.s32.totalorder %s19, 0
      %p192 = por %p190, %p191
      %p193 = scmp.ne.s32.totalorder %s179, %s180
      %p194 = scmp.eq.s32.totalorder %s20, 1
      %p195 = por %p193, %p194
      %p197 = scmp.ne.s32.totalorder %s180, %s196
      %p198 = scmp.eq.s32.totalorder %s20, 0
      %p199 = por %p197, %p198
      %p200 = scmp.le.s32.totalorder 1, %s14
      %p201 = scmp.lt.s32.totalorder %s14, 3
      %p202 = pnand %p200, %p201
      %p203 = pneg %p202
      // Predicated region
      $region9: #{down_forward.1} parent=5 // pred_check
        _
      $region10: #{down_forward.1} parent=5 // pred_check_branch
        %205 = sbr.rel (%p202) target = $region12
      $region11: #{down_forward.1} parent=5 // pred_region
        %s206 = ssub.s32 %s14, 1
        // Predicated region
        $region13: #{down_forward.1} parent=11 // pred_check
          %p207 = pneg %p61
        $region14: #{down_forward.1} parent=11 // pred_check_branch
          %209 = sbr.rel (%p207) target = $region16
        $region15: #{down_forward.1} parent=11 // pred_region
          _
        $region16: #{down_forward.1} parent=11 // pred_fallthru
          _
        // Predicated region
        $region17: #{down_forward.1} parent=11 // pred_check
          %p210 = pneg %p82
        $region18: #{down_forward.1} parent=11 // pred_check_branch
          %212 = sbr.rel (%p210) target = $region20
        $region19: #{down_forward.1} parent=11 // pred_region
          _
        $region20: #{down_forward.1} parent=11 // pred_fallthru
          _
        // Predicated region
        $region21: #{down_forward.1} parent=11 // pred_check
          %p213 = pneg %p103
        $region22: #{down_forward.1} parent=11 // pred_check_branch
          %215 = sbr.rel (%p213) target = $region24
        $region23: #{down_forward.1} parent=11 // pred_region
          _
        $region24: #{down_forward.1} parent=11 // pred_fallthru
          _
        // Predicated region
        $region25: #{down_forward.1} parent=11 // pred_check
          %p216 = pneg %p124
        $region26: #{down_forward.1} parent=11 // pred_check_branch
          %218 = sbr.rel (%p216) target = $region28
        $region27: #{down_forward.1} parent=11 // pred_region
          %220 = vsyncadd [#allocation7], 0
          %s221 = sshll.u32 %s4, 4
          %s222 = int_to_ptr.hbm [resolvable:$true] %s221
          %s223 = sshll.u32 [#allocation6], 4
          %s224 = int_to_ptr.vmem [resolvable:$true] %s223
          %229 = dma.hbm_to_vmem [thread:$0]  %s222, 18432, %s224, [#allocation7], 128, 128, 8
        $region28: #{down_forward.1} parent=11 // pred_fallthru
          _
        // Predicated region
        $region29: #{down_forward.1} parent=11 // pred_check
          %p230 = pneg %p145
        $region30: #{down_forward.1} parent=11 // pred_check_branch
          %232 = sbr.rel (%p230) target = $region32
        $region31: #{down_forward.1} parent=11 // pred_region
          _
        $region32: #{down_forward.1} parent=11 // pred_fallthru
          _
        // Predicated region
        $region33: #{down_forward.1} parent=11 // pred_check
          %p233 = pneg %p166
        $region34: #{down_forward.1} parent=11 // pred_check_branch
          %235 = sbr.rel (%p233) target = $region36
        $region35: #{down_forward.1} parent=11 // pred_region
          _
        $region36: #{down_forward.1} parent=11 // pred_fallthru
          _
      $region12: #{down_forward.1} parent=5 // pred_fallthru
        _
      %p236 = scmp.lt.s32.totalorder %s14, 2
      // Predicated region
      $region37: #{down_forward.1} parent=5 // pred_check
        %p237 = pneg %p236
      $region38: #{down_forward.1} parent=5 // pred_check_branch
        %239 = sbr.rel (%p237) target = $region40
      $region39: #{down_forward.1} parent=5 // pred_region
        // Predicated region
        $region41: #{down_forward.1} parent=39 // pred_check
          %p240 = pneg %p34
        $region42: #{down_forward.1} parent=39 // pred_check_branch
          %242 = sbr.rel (%p240) target = $region44
        $region43: #{down_forward.1} parent=39 // pred_region
          %p243 = scmp.lt.s32.totalorder %s14, 1
          %s244 = scalar_select %p243, %s14, 1
          %s245 = smul.addr %s244, 16
          %s246 = smul.addr %s245, 8
          %s247 = scalar_lea.vmem %s0, %s246
        $region44: #{down_forward.1} parent=39 // pred_fallthru
          _
      $region40: #{down_forward.1} parent=5 // pred_fallthru
        _
      %p248 = scmp.le.s32.totalorder 1, %s14
      %p249 = scmp.lt.s32.totalorder %s14, 3
      %p250 = pnand %p248, %p249
      %p251 = pneg %p250
      // Predicated region
      $region45: #{down_forward.1} parent=5 // pred_check
        _
      $region46: #{down_forward.1} parent=5 // pred_check_branch
        %253 = sbr.rel (%p250) target = $region48
      $region47: #{down_forward.1} parent=5 // pred_region
        %s254 = ssub.s32 %s14, 1
        // Predicated region
        $region49: #{down_forward.1} parent=47 // pred_check
          %p255 = pneg %p124
        $region50: #{down_forward.1} parent=47 // pred_check_branch
          %257 = sbr.rel (%p255) target = $region52
        $region51: #{down_forward.1} parent=47 // pred_region
          %259 = dma.done [#allocation7], 18432
        $region52: #{down_forward.1} parent=47 // pred_fallthru
          _
        %p260 = scmp.lt.s32.totalorder %s19, 1
        %s261 = scalar_select %p260, %s19, 1
        %s262 = smul.addr %s261, 16
        %s263 = smul.addr %s262, 8
        %s264 = scalar_lea.vmem %s0, %s263
        %p265 = pneg %p40
        %p266 = pneg %p37
        %p267 = pneg %p61
        %p268 = pneg %p58
        %p269 = pneg %p82
        %p270 = pneg %p79
        %p271 = pneg %p103
        %p272 = pneg %p100
        %p273 = pneg %p124
        %p274 = pneg %p121
        %p275 = pneg %p145
        %p276 = pneg %p142
        %p277 = pneg %p166
        %p278 = pneg %p163
        %p279 = pneg %p192
        %p280 = pneg %p189
        %p281 = scmp.lt.s32.totalorder %s19, 1
        %s282 = scalar_select %p281, %s19, 1
        %s283 = smul.addr %s282, 8
        %s284 = smul.addr %s283, 8
        %s285 = scalar_lea.vmem %s7, %s284
        %p286 = scmp.lt.s32.totalorder %s19, 1
        %s287 = scalar_select %p286, %s19, 1
        %s288 = smul.addr %s287, 16
        %s289 = smul.addr %s288, 8
        %s290 = scalar_lea.vmem %s0, %s289
        %p291 = scmp.lt.s32.totalorder %s19, 1
        %s292 = scalar_select %p291, %s19, 1
        %s293 = smul.addr %s292, 8
        %s294 = smul.addr %s293, 8
        %s295 = scalar_lea.vmem %s7, %s294
        %v296 = vld [vmem:[%s290] sm:$0xff]
        %v297 = vld [vmem:[%s290 + $0x8] sm:$0xff]
        %v298 = vld [vmem:[%s290 + $0x10] sm:$0xff]
        %v299 = vld [vmem:[%s290 + $0x18] sm:$0xff]
        %v300 = vld [vmem:[%s290 + $0x20] sm:$0xff]
        %v301 = vld [vmem:[%s290 + $0x28] sm:$0xff]
        %v302 = vld [vmem:[%s290 + $0x30] sm:$0xff]
        %v303 = vld [vmem:[%s290 + $0x38] sm:$0xff]
        %v304 = vld [vmem:[%s290 + $0x40] sm:$0xff]
        %v305 = vld [vmem:[%s290 + $0x48] sm:$0xff]
        %v306 = vld [vmem:[%s290 + $0x50] sm:$0xff]
        %v307 = vld [vmem:[%s290 + $0x58] sm:$0xff]
        %v308 = vld [vmem:[%s290 + $0x60] sm:$0xff]
        %v309 = vld [vmem:[%s290 + $0x68] sm:$0xff]
        %v310 = vld [vmem:[%s290 + $0x70] sm:$0xff]
        %v311 = vld [vmem:[%s290 + $0x78] sm:$0xff]
        %v312 = vmax.f32 %v296, %v297
        %v313 = vmax.f32 %v298, %v299
        %v314 = vmax.f32 %v300, %v301
        %v315 = vmax.f32 %v302, %v303
        %v316 = vmax.f32 %v304, %v305
        %v317 = vmax.f32 %v306, %v307
        %v318 = vmax.f32 %v308, %v309
        %v319 = vmax.f32 %v310, %v311
        %328 = vrot.lane.b32.xlu0 %v312, 124
        %v329 = vpop.permute.xlu0 %328
        %330 = vrot.lane.b32.xlu0 %v313, 124
        %v331 = vpop.permute.xlu0 %330
        %332 = vrot.lane.b32.xlu0 %v314, 124
        %v333 = vpop.permute.xlu0 %332
        %334 = vrot.lane.b32.xlu0 %v315, 124
        %v335 = vpop.permute.xlu0 %334
        %336 = vrot.lane.b32.xlu0 %v316, 124
        %v337 = vpop.permute.xlu0 %336
        %338 = vrot.lane.b32.xlu0 %v317, 124
        %v339 = vpop.permute.xlu0 %338
        %340 = vrot.lane.b32.xlu0 %v318, 124
        %v341 = vpop.permute.xlu0 %340
        %342 = vrot.lane.b32.xlu0 %v319, 124
        %v343 = vpop.permute.xlu0 %342
        %v352 = vmax.f32 %v312, %v329
        %v353 = vmax.f32 %v313, %v331
        %v354 = vmax.f32 %v314, %v333
        %v355 = vmax.f32 %v315, %v335
        %v356 = vmax.f32 %v316, %v337
        %v357 = vmax.f32 %v317, %v339
        %v358 = vmax.f32 %v318, %v341
        %v359 = vmax.f32 %v319, %v343
        %s360 = scalar_lea.vmem [#allocation2], 16
        %vm361 = vcmask 31744
        %362 = vst.msk [vmem:[%s360 + $0x1] sm:$0xff] %vm361, %v352
        %363 = vst.msk [vmem:[%s360 + $0x11] sm:$0xff] %vm361, %v353
        %364 = vst.msk [vmem:[%s360 + $0x21] sm:$0xff] %vm361, %v354
        %365 = vst.msk [vmem:[%s360 + $0x31] sm:$0xff] %vm361, %v355
        %366 = vst.msk [vmem:[%s360 + $0x41] sm:$0xff] %vm361, %v356
        %367 = vst.msk [vmem:[%s360 + $0x51] sm:$0xff] %vm361, %v357
        %368 = vst.msk [vmem:[%s360 + $0x61] sm:$0xff] %vm361, %v358
        %369 = vst.msk [vmem:[%s360 + $0x71] sm:$0xff] %vm361, %v359
        %370 = vst.msk [vmem:[#allocation2 + $0x1] sm:$0xff] %vm361, %v353
        %s371 = scalar_lea.vmem [#allocation2], 144
        %372 = vst.msk [vmem:[%s371 + $0x1] sm:$0xff] %vm361, %v358
        %v373 = vld [vmem:[#allocation2 + $0x2] sm:$0x1]
        %v374 = vld [vmem:[#allocation2 + $0x12] sm:$0x1]
        %v375 = vld [vmem:[#allocation2 + $0x22] sm:$0x1]
        %v376 = vld [vmem:[#allocation2 + $0x32] sm:$0x1]
        %v377 = vld [vmem:[#allocation2 + $0x42] sm:$0x1]
        %v378 = vld [vmem:[#allocation2 + $0x52] sm:$0x1]
        %v379 = vld [vmem:[#allocation2 + $0x62] sm:$0x1]
        %v380 = vld [vmem:[#allocation2 + $0x72] sm:$0x1]
        %v381 = vld [vmem:[#allocation2 + $0x82] sm:$0x1]
        %v382 = vld [vmem:[#allocation2 + $0x92] sm:$0x1]
        %vm383 = vcmask 24576
        %384 = vst.msk [vmem:[#allocation2] sm:$0x1] %vm383, %v373
        %385 = vst.msk [vmem:[#allocation2 + $0x10] sm:$0x1] %vm383, %v374
        %386 = vst.msk [vmem:[#allocation2 + $0x20] sm:$0x1] %vm383, %v375
        %387 = vst.msk [vmem:[#allocation2 + $0x30] sm:$0x1] %vm383, %v376
        %388 = vst.msk [vmem:[#allocation2 + $0x40] sm:$0x1] %vm383, %v377
        %389 = vst.msk [vmem:[#allocation2 + $0x50] sm:$0x1] %vm383, %v378
        %390 = vst.msk [vmem:[#allocation2 + $0x60] sm:$0x1] %vm383, %v379
        %391 = vst.msk [vmem:[#allocation2 + $0x70] sm:$0x1] %vm383, %v380
        %392 = vst.msk [vmem:[#allocation2 + $0x80] sm:$0x1] %vm383, %v381
        %393 = vst.msk [vmem:[#allocation2 + $0x90] sm:$0x1] %vm383, %v382
        %v394 = vld [vmem:[#allocation2 + $0x7] sm:$0x1]
        %v395 = vld [vmem:[#allocation2 + $0x17] sm:$0x1]
        %v396 = vld [vmem:[#allocation2 + $0x27] sm:$0x1]
        %v397 = vld [vmem:[#allocation2 + $0x37] sm:$0x1]
        %v398 = vld [vmem:[#allocation2 + $0x47] sm:$0x1]
        %v399 = vld [vmem:[#allocation2 + $0x57] sm:$0x1]
        %v400 = vld [vmem:[#allocation2 + $0x67] sm:$0x1]
        %v401 = vld [vmem:[#allocation2 + $0x77] sm:$0x1]
        %v402 = vld [vmem:[#allocation2 + $0x87] sm:$0x1]
        %v403 = vld [vmem:[#allocation2 + $0x97] sm:$0x1]
        %404 = vst.msk [vmem:[#allocation2 + $0x9] sm:$0x1] %vm383, %v394
        %405 = vst.msk [vmem:[#allocation2 + $0x19] sm:$0x1] %vm383, %v395
        %406 = vst.msk [vmem:[#allocation2 + $0x29] sm:$0x1] %vm383, %v396
        %407 = vst.msk [vmem:[#allocation2 + $0x39] sm:$0x1] %vm383, %v397
        %408 = vst.msk [vmem:[#allocation2 + $0x49] sm:$0x1] %vm383, %v398
        %409 = vst.msk [vmem:[#allocation2 + $0x59] sm:$0x1] %vm383, %v399
        %410 = vst.msk [vmem:[#allocation2 + $0x69] sm:$0x1] %vm383, %v400
        %411 = vst.msk [vmem:[#allocation2 + $0x79] sm:$0x1] %vm383, %v401
        %412 = vst.msk [vmem:[#allocation2 + $0x89] sm:$0x1] %vm383, %v402
        %413 = vst.msk [vmem:[#allocation2 + $0x99] sm:$0x1] %vm383, %v403
        %v414 = vld [vmem:[#allocation2] sm:$0xff]
        %v415 = vld [vmem:[#allocation2 + $0x10] sm:$0xff]
        %v416 = vld [vmem:[#allocation2 + $0x20] sm:$0xff]
        %v417 = vld [vmem:[#allocation2 + $0x30] sm:$0xff]
        %v418 = vld [vmem:[#allocation2 + $0x40] sm:$0xff]
        %v419 = vld [vmem:[#allocation2 + $0x50] sm:$0xff]
        %v420 = vld [vmem:[#allocation2 + $0x60] sm:$0xff]
        %v421 = vld [vmem:[#allocation2 + $0x70] sm:$0xff]
        %422 = vst.msk [vmem:[#allocation3] sm:$0xff] %vm361, %v414
        %423 = vst.msk [vmem:[#allocation3 + $0x8] sm:$0xff] %vm361, %v415
        %424 = vst.msk [vmem:[#allocation3 + $0x10] sm:$0xff] %vm361, %v416
        %425 = vst.msk [vmem:[#allocation3 + $0x18] sm:$0xff] %vm361, %v417
        %426 = vst.msk [vmem:[#allocation3 + $0x20] sm:$0xff] %vm361, %v418
        %427 = vst.msk [vmem:[#allocation3 + $0x28] sm:$0xff] %vm361, %v419
        %428 = vst.msk [vmem:[#allocation3 + $0x30] sm:$0xff] %vm361, %v420
        %429 = vst.msk [vmem:[#allocation3 + $0x38] sm:$0xff] %vm361, %v421
        %v430 = vld [vmem:[#allocation2 + $0x1] sm:$0xff]
        %v431 = vld [vmem:[#allocation2 + $0x11] sm:$0xff]
        %v432 = vld [vmem:[#allocation2 + $0x21] sm:$0xff]
        %v433 = vld [vmem:[#allocation2 + $0x31] sm:$0xff]
        %v434 = vld [vmem:[#allocation2 + $0x41] sm:$0xff]
        %v435 = vld [vmem:[#allocation2 + $0x51] sm:$0xff]
        %v436 = vld [vmem:[#allocation2 + $0x61] sm:$0xff]
        %v437 = vld [vmem:[#allocation2 + $0x71] sm:$0xff]
        %446 = vrot.lane.b32.xlu0 %v430, 4
        %v447 = vpop.permute.xlu0 %446
        %448 = vrot.lane.b32.xlu0 %v431, 4
        %v449 = vpop.permute.xlu0 %448
        %450 = vrot.lane.b32.xlu0 %v432, 4
        %v451 = vpop.permute.xlu0 %450
        %452 = vrot.lane.b32.xlu0 %v433, 4
        %v453 = vpop.permute.xlu0 %452
        %454 = vrot.lane.b32.xlu0 %v434, 4
        %v455 = vpop.permute.xlu0 %454
        %456 = vrot.lane.b32.xlu0 %v435, 4
        %v457 = vpop.permute.xlu0 %456
        %458 = vrot.lane.b32.xlu0 %v436, 4
        %v459 = vpop.permute.xlu0 %458
        %460 = vrot.lane.b32.xlu0 %v437, 4
        %v461 = vpop.permute.xlu0 %460
        %vm470 = vcmask 64544
        %471 = vst.msk [vmem:[#allocation3] sm:$0xff] %vm470, %v447
        %472 = vst.msk [vmem:[#allocation3 + $0x8] sm:$0xff] %vm470, %v449
        %473 = vst.msk [vmem:[#allocation3 + $0x10] sm:$0xff] %vm470, %v451
        %474 = vst.msk [vmem:[#allocation3 + $0x18] sm:$0xff] %vm470, %v453
        %475 = vst.msk [vmem:[#allocation3 + $0x20] sm:$0xff] %vm470, %v455
        %476 = vst.msk [vmem:[#allocation3 + $0x28] sm:$0xff] %vm470, %v457
        %477 = vst.msk [vmem:[#allocation3 + $0x30] sm:$0xff] %vm470, %v459
        %478 = vst.msk [vmem:[#allocation3 + $0x38] sm:$0xff] %vm470, %v461
        %v479 = vld [vmem:[#allocation2 + $0x2] sm:$0xff]
        %v480 = vld [vmem:[#allocation2 + $0x12] sm:$0xff]
        %v481 = vld [vmem:[#allocation2 + $0x22] sm:$0xff]
        %v482 = vld [vmem:[#allocation2 + $0x32] sm:$0xff]
        %v483 = vld [vmem:[#allocation2 + $0x42] sm:$0xff]
        %v484 = vld [vmem:[#allocation2 + $0x52] sm:$0xff]
        %v485 = vld [vmem:[#allocation2 + $0x62] sm:$0xff]
        %v486 = vld [vmem:[#allocation2 + $0x72] sm:$0xff]
        %495 = vrot.lane.b32.xlu0 %v479, 8
        %v496 = vpop.permute.xlu0 %495
        %497 = vrot.lane.b32.xlu0 %v480, 8
        %v498 = vpop.permute.xlu0 %497
        %499 = vrot.lane.b32.xlu0 %v481, 8
        %v500 = vpop.permute.xlu0 %499
        %501 = vrot.lane.b32.xlu0 %v482, 8
        %v502 = vpop.permute.xlu0 %501
        %503 = vrot.lane.b32.xlu0 %v483, 8
        %v504 = vpop.permute.xlu0 %503
        %505 = vrot.lane.b32.xlu0 %v484, 8
        %v506 = vpop.permute.xlu0 %505
        %507 = vrot.lane.b32.xlu0 %v485, 8
        %v508 = vpop.permute.xlu0 %507
        %509 = vrot.lane.b32.xlu0 %v486, 8
        %v510 = vpop.permute.xlu0 %509
        %vm519 = vcmask 97344
        %520 = vst.msk [vmem:[#allocation3] sm:$0xff] %vm519, %v496
        %521 = vst.msk [vmem:[#allocation3 + $0x8] sm:$0xff] %vm519, %v498
        %522 = vst.msk [vmem:[#allocation3 + $0x10] sm:$0xff] %vm519, %v500
        %523 = vst.msk [vmem:[#allocation3 + $0x18] sm:$0xff] %vm519, %v502
        %524 = vst.msk [vmem:[#allocation3 + $0x20] sm:$0xff] %vm519, %v504
        %525 = vst.msk [vmem:[#allocation3 + $0x28] sm:$0xff] %vm519, %v506
        %526 = vst.msk [vmem:[#allocation3 + $0x30] sm:$0xff] %vm519, %v508
        %527 = vst.msk [vmem:[#allocation3 + $0x38] sm:$0xff] %vm519, %v510
        %v528 = vld [vmem:[%s360] sm:$0xff]
        %v529 = vld [vmem:[%s360 + $0x10] sm:$0xff]
        %v530 = vld [vmem:[%s360 + $0x20] sm:$0xff]
        %v531 = vld [vmem:[%s360 + $0x30] sm:$0xff]
        %v532 = vld [vmem:[%s360 + $0x40] sm:$0xff]
        %v533 = vld [vmem:[%s360 + $0x50] sm:$0xff]
        %v534 = vld [vmem:[%s360 + $0x60] sm:$0xff]
        %v535 = vld [vmem:[%s360 + $0x70] sm:$0xff]
        %544 = vrot.lane.b32.xlu0 %v528, 12
        %v545 = vpop.permute.xlu0 %544
        %546 = vrot.lane.b32.xlu0 %v529, 12
        %v547 = vpop.permute.xlu0 %546
        %548 = vrot.lane.b32.xlu0 %v530, 12
        %v549 = vpop.permute.xlu0 %548
        %550 = vrot.lane.b32.xlu0 %v531, 12
        %v551 = vpop.permute.xlu0 %550
        %552 = vrot.lane.b32.xlu0 %v532, 12
        %v553 = vpop.permute.xlu0 %552
        %554 = vrot.lane.b32.xlu0 %v533, 12
        %v555 = vpop.permute.xlu0 %554
        %556 = vrot.lane.b32.xlu0 %v534, 12
        %v557 = vpop.permute.xlu0 %556
        %558 = vrot.lane.b32.xlu0 %v535, 12
        %v559 = vpop.permute.xlu0 %558
        %vm568 = vcmask 130144
        %569 = vst.msk [vmem:[#allocation3] sm:$0xff] %vm568, %v545
        %570 = vst.msk [vmem:[#allocation3 + $0x8] sm:$0xff] %vm568, %v547
        %571 = vst.msk [vmem:[#allocation3 + $0x10] sm:$0xff] %vm568, %v549
        %572 = vst.msk [vmem:[#allocation3 + $0x18] sm:$0xff] %vm568, %v551
        %573 = vst.msk [vmem:[#allocation3 + $0x20] sm:$0xff] %vm568, %v553
        %574 = vst.msk [vmem:[#allocation3 + $0x28] sm:$0xff] %vm568, %v555
        %575 = vst.msk [vmem:[#allocation3 + $0x30] sm:$0xff] %vm568, %v557
        %576 = vst.msk [vmem:[#allocation3 + $0x38] sm:$0xff] %vm568, %v559
        %v577 = vld [vmem:[%s360 + $0x1] sm:$0xff]
        %v578 = vld [vmem:[%s360 + $0x11] sm:$0xff]
        %v579 = vld [vmem:[%s360 + $0x21] sm:$0xff]
        %v580 = vld [vmem:[%s360 + $0x31] sm:$0xff]
        %v581 = vld [vmem:[%s360 + $0x41] sm:$0xff]
        %v582 = vld [vmem:[%s360 + $0x51] sm:$0xff]
        %v583 = vld [vmem:[%s360 + $0x61] sm:$0xff]
        %v584 = vld [vmem:[%s360 + $0x71] sm:$0xff]
        %593 = vrot.lane.b32.xlu0 %v577, 16
        %v594 = vpop.permute.xlu0 %593
        %595 = vrot.lane.b32.xlu0 %v578, 16
        %v596 = vpop.permute.xlu0 %595
        %597 = vrot.lane.b32.xlu0 %v579, 16
        %v598 = vpop.permute.xlu0 %597
        %599 = vrot.lane.b32.xlu0 %v580, 16
        %v600 = vpop.permute.xlu0 %599
        %601 = vrot.lane.b32.xlu0 %v581, 16
        %v602 = vpop.permute.xlu0 %601
        %603 = vrot.lane.b32.xlu0 %v582, 16
        %v604 = vpop.permute.xlu0 %603
        %605 = vrot.lane.b32.xlu0 %v583, 16
        %v606 = vpop.permute.xlu0 %605
        %607 = vrot.lane.b32.xlu0 %v584, 16
        %v608 = vpop.permute.xlu0 %607
        %vm617 = vcmask 162944
        %618 = vst.msk [vmem:[#allocation3] sm:$0xff] %vm617, %v594
        %619 = vst.msk [vmem:[#allocation3 + $0x8] sm:$0xff] %vm617, %v596
        %620 = vst.msk [vmem:[#allocation3 + $0x10] sm:$0xff] %vm617, %v598
        %621 = vst.msk [vmem:[#allocation3 + $0x18] sm:$0xff] %vm617, %v600
        %622 = vst.msk [vmem:[#allocation3 + $0x20] sm:$0xff] %vm617, %v602
        %623 = vst.msk [vmem:[#allocation3 + $0x28] sm:$0xff] %vm617, %v604
        %624 = vst.msk [vmem:[#allocation3 + $0x30] sm:$0xff] %vm617, %v606
        %625 = vst.msk [vmem:[#allocation3 + $0x38] sm:$0xff] %vm617, %v608
        %v626 = vld [vmem:[%s360 + $0x2] sm:$0xff]
        %v627 = vld [vmem:[%s360 + $0x12] sm:$0xff]
        %v628 = vld [vmem:[%s360 + $0x22] sm:$0xff]
        %v629 = vld [vmem:[%s360 + $0x32] sm:$0xff]
        %v630 = vld [vmem:[%s360 + $0x42] sm:$0xff]
        %v631 = vld [vmem:[%s360 + $0x52] sm:$0xff]
        %v632 = vld [vmem:[%s360 + $0x62] sm:$0xff]
        %v633 = vld [vmem:[%s360 + $0x72] sm:$0xff]
        %642 = vrot.lane.b32.xlu0 %v626, 20
        %v643 = vpop.permute.xlu0 %642
        %644 = vrot.lane.b32.xlu0 %v627, 20
        %v645 = vpop.permute.xlu0 %644
        %646 = vrot.lane.b32.xlu0 %v628, 20
        %v647 = vpop.permute.xlu0 %646
        %648 = vrot.lane.b32.xlu0 %v629, 20
        %v649 = vpop.permute.xlu0 %648
        %650 = vrot.lane.b32.xlu0 %v630, 20
        %v651 = vpop.permute.xlu0 %650
        %652 = vrot.lane.b32.xlu0 %v631, 20
        %v653 = vpop.permute.xlu0 %652
        %654 = vrot.lane.b32.xlu0 %v632, 20
        %v655 = vpop.permute.xlu0 %654
        %656 = vrot.lane.b32.xlu0 %v633, 20
        %v657 = vpop.permute.xlu0 %656
        %vm666 = vcmask 195744
        %667 = vst.msk [vmem:[#allocation3] sm:$0xff] %vm666, %v643
        %668 = vst.msk [vmem:[#allocation3 + $0x8] sm:$0xff] %vm666, %v645
        %669 = vst.msk [vmem:[#allocation3 + $0x10] sm:$0xff] %vm666, %v647
        %670 = vst.msk [vmem:[#allocation3 + $0x18] sm:$0xff] %vm666, %v649
        %671 = vst.msk [vmem:[#allocation3 + $0x20] sm:$0xff] %vm666, %v651
        %672 = vst.msk [vmem:[#allocation3 + $0x28] sm:$0xff] %vm666, %v653
        %673 = vst.msk [vmem:[#allocation3 + $0x30] sm:$0xff] %vm666, %v655
        %674 = vst.msk [vmem:[#allocation3 + $0x38] sm:$0xff] %vm666, %v657
        %s675 = scalar_lea.vmem [#allocation2], 32
        %v676 = vld [vmem:[%s675] sm:$0xff]
        %v677 = vld [vmem:[%s675 + $0x10] sm:$0xff]
        %v678 = vld [vmem:[%s675 + $0x20] sm:$0xff]
        %v679 = vld [vmem:[%s675 + $0x30] sm:$0xff]
        %v680 = vld [vmem:[%s675 + $0x40] sm:$0xff]
        %v681 = vld [vmem:[%s675 + $0x50] sm:$0xff]
        %v682 = vld [vmem:[%s675 + $0x60] sm:$0xff]
        %v683 = vld [vmem:[%s675 + $0x70] sm:$0xff]
        %692 = vrot.lane.b32.xlu0 %v676, 24
        %v693 = vpop.permute.xlu0 %692
        %694 = vrot.lane.b32.xlu0 %v677, 24
        %v695 = vpop.permute.xlu0 %694
        %696 = vrot.lane.b32.xlu0 %v678, 24
        %v697 = vpop.permute.xlu0 %696
        %698 = vrot.lane.b32.xlu0 %v679, 24
        %v699 = vpop.permute.xlu0 %698
        %700 = vrot.lane.b32.xlu0 %v680, 24
        %v701 = vpop.permute.xlu0 %700
        %702 = vrot.lane.b32.xlu0 %v681, 24
        %v703 = vpop.permute.xlu0 %702
        %704 = vrot.lane.b32.xlu0 %v682, 24
        %v705 = vpop.permute.xlu0 %704
        %706 = vrot.lane.b32.xlu0 %v683, 24
        %v707 = vpop.permute.xlu0 %706
        %vm716 = vcmask 228544
        %717 = vst.msk [vmem:[#allocation3] sm:$0xff] %vm716, %v693
        %718 = vst.msk [vmem:[#allocation3 + $0x8] sm:$0xff] %vm716, %v695
        %719 = vst.msk [vmem:[#allocation3 + $0x10] sm:$0xff] %vm716, %v697
        %720 = vst.msk [vmem:[#allocation3 + $0x18] sm:$0xff] %vm716, %v699
        %721 = vst.msk [vmem:[#allocation3 + $0x20] sm:$0xff] %vm716, %v701
        %722 = vst.msk [vmem:[#allocation3 + $0x28] sm:$0xff] %vm716, %v703
        %723 = vst.msk [vmem:[#allocation3 + $0x30] sm:$0xff] %vm716, %v705
        %724 = vst.msk [vmem:[#allocation3 + $0x38] sm:$0xff] %vm716, %v707
        %v725 = vld [vmem:[%s675 + $0x1] sm:$0xff]
        %v726 = vld [vmem:[%s675 + $0x11] sm:$0xff]
        %v727 = vld [vmem:[%s675 + $0x21] sm:$0xff]
        %v728 = vld [vmem:[%s675 + $0x31] sm:$0xff]
        %v729 = vld [vmem:[%s675 + $0x41] sm:$0xff]
        %v730 = vld [vmem:[%s675 + $0x51] sm:$0xff]
        %v731 = vld [vmem:[%s675 + $0x61] sm:$0xff]
        %v732 = vld [vmem:[%s675 + $0x71] sm:$0xff]
        %741 = vrot.lane.b32.xlu0 %v725, 28
        %v742 = vpop.permute.xlu0 %741
        %743 = vrot.lane.b32.xlu0 %v726, 28
        %v744 = vpop.permute.xlu0 %743
        %745 = vrot.lane.b32.xlu0 %v727, 28
        %v746 = vpop.permute.xlu0 %745
        %747 = vrot.lane.b32.xlu0 %v728, 28
        %v748 = vpop.permute.xlu0 %747
        %749 = vrot.lane.b32.xlu0 %v729, 28
        %v750 = vpop.permute.xlu0 %749
        %751 = vrot.lane.b32.xlu0 %v730, 28
        %v752 = vpop.permute.xlu0 %751
        %753 = vrot.lane.b32.xlu0 %v731, 28
        %v754 = vpop.permute.xlu0 %753
        %755 = vrot.lane.b32.xlu0 %v732, 28
        %v756 = vpop.permute.xlu0 %755
        %vm765 = vcmask 261344
        %766 = vst.msk [vmem:[#allocation3] sm:$0xff] %vm765, %v742
        %767 = vst.msk [vmem:[#allocation3 + $0x8] sm:$0xff] %vm765, %v744
        %768 = vst.msk [vmem:[#allocation3 + $0x10] sm:$0xff] %vm765, %v746
        %769 = vst.msk [vmem:[#allocation3 + $0x18] sm:$0xff] %vm765, %v748
        %770 = vst.msk [vmem:[#allocation3 + $0x20] sm:$0xff] %vm765, %v750
        %771 = vst.msk [vmem:[#allocation3 + $0x28] sm:$0xff] %vm765, %v752
        %772 = vst.msk [vmem:[#allocation3 + $0x30] sm:$0xff] %vm765, %v754
        %773 = vst.msk [vmem:[#allocation3 + $0x38] sm:$0xff] %vm765, %v756
        %v774 = vld [vmem:[%s675 + $0x2] sm:$0xff]
        %v775 = vld [vmem:[%s675 + $0x12] sm:$0xff]
        %v776 = vld [vmem:[%s675 + $0x22] sm:$0xff]
        %v777 = vld [vmem:[%s675 + $0x32] sm:$0xff]
        %v778 = vld [vmem:[%s675 + $0x42] sm:$0xff]
        %v779 = vld [vmem:[%s675 + $0x52] sm:$0xff]
        %v780 = vld [vmem:[%s675 + $0x62] sm:$0xff]
        %v781 = vld [vmem:[%s675 + $0x72] sm:$0xff]
        %790 = vrot.lane.b32.xlu0 %v774, 32
        %v791 = vpop.permute.xlu0 %790
        %792 = vrot.lane.b32.xlu0 %v775, 32
        %v793 = vpop.permute.xlu0 %792
        %794 = vrot.lane.b32.xlu0 %v776, 32
        %v795 = vpop.permute.xlu0 %794
        %796 = vrot.lane.b32.xlu0 %v777, 32
        %v797 = vpop.permute.xlu0 %796
        %798 = vrot.lane.b32.xlu0 %v778, 32
        %v799 = vpop.permute.xlu0 %798
        %800 = vrot.lane.b32.xlu0 %v779, 32
        %v801 = vpop.permute.xlu0 %800
        %802 = vrot.lane.b32.xlu0 %v780, 32
        %v803 = vpop.permute.xlu0 %802
        %804 = vrot.lane.b32.xlu0 %v781, 32
        %v805 = vpop.permute.xlu0 %804
        %vm814 = vcmask 294144
        %815 = vst.msk [vmem:[#allocation3] sm:$0xff] %vm814, %v791
        %816 = vst.msk [vmem:[#allocation3 + $0x8] sm:$0xff] %vm814, %v793
        %817 = vst.msk [vmem:[#allocation3 + $0x10] sm:$0xff] %vm814, %v795
        %818 = vst.msk [vmem:[#allocation3 + $0x18] sm:$0xff] %vm814, %v797
        %819 = vst.msk [vmem:[#allocation3 + $0x20] sm:$0xff] %vm814, %v799
        %820 = vst.msk [vmem:[#allocation3 + $0x28] sm:$0xff] %vm814, %v801
        %821 = vst.msk [vmem:[#allocation3 + $0x30] sm:$0xff] %vm814, %v803
        %822 = vst.msk [vmem:[#allocation3 + $0x38] sm:$0xff] %vm814, %v805
        %v823 = vld [vmem:[#allocation3] sm:$0xff]
        %v824 = vld [vmem:[#allocation3 + $0x8] sm:$0xff]
        %v825 = vld [vmem:[#allocation3 + $0x10] sm:$0xff]
        %v826 = vld [vmem:[#allocation3 + $0x18] sm:$0xff]
        %v827 = vld [vmem:[#allocation3 + $0x20] sm:$0xff]
        %v828 = vld [vmem:[#allocation3 + $0x28] sm:$0xff]
        %v829 = vld [vmem:[#allocation3 + $0x30] sm:$0xff]
        %v830 = vld [vmem:[#allocation3 + $0x38] sm:$0xff]
        %v831 = vld [vmem:[%s1] sm:$0xff]
        %v832 = vld [vmem:[%s1 + $0x8] sm:$0xff]
        %v833 = vld [vmem:[%s1 + $0x10] sm:$0xff]
        %v834 = vld [vmem:[%s1 + $0x18] sm:$0xff]
        %v835 = vld [vmem:[%s1 + $0x20] sm:$0xf]
        %vm836 = vcmask 293888
        %v838 = vsel %vm836, %v823, 0
        %v841 = vsel %vm836, %v824, 0
        %v844 = vsel %vm836, %v825, 0
        %v847 = vsel %vm836, %v826, 0
        %v850 = vsel %vm836, %v827, 0
        %v853 = vsel %vm836, %v828, 0
        %v856 = vsel %vm836, %v829, 0
        %v859 = vsel %vm836, %v830, 0
        %vm861 = vcmask 1043456
        %v863 = vsel %vm861, %v835, 0
        %865 = vmatpush.msra.mxu0 0.0
        %866 = vmatpush.msra.mxu0 0.0
        %867 = vmatpush.msra.mxu0 0.0
        %868 = vmatpush.msra.mxu0 0.0
        %869 = vmatpush.msra.mxu0 0.0
        %870 = vmatpush.msra.mxu0 0.0
        %871 = vmatpush.msra.mxu0 0.0
        %872 = vmatpush.msra.mxu0 0.0
        %873 = vmatpush.msra.mxu0 0.0
        %874 = vmatpush.msra.mxu0 0.0
        %875 = vmatpush.msra.mxu0 0.0
        %876 = vmatpush.msra.mxu0 %v863
        %877 = vmatpush.msra.mxu0 %v834
        %878 = vmatpush.msra.mxu0 %v833
        %879 = vmatpush.msra.mxu0 %v832
        %880 = vmatpush.msra.mxu0 %v831
        %881 = vmatmul.f32.gmra.mxu0 %v838
        %v882 = vpop.f32.mrf.mxu0
        %v883 = vadd.f32 0.0, %v882
        %884 = vmatmul.f32.gmra.mxu0 %v841
        %v885 = vpop.f32.mrf.mxu0
        %v886 = vadd.f32 0.0, %v885
        %887 = vmatmul.f32.gmra.mxu0 %v844
        %v888 = vpop.f32.mrf.mxu0
        %v889 = vadd.f32 0.0, %v888
        %890 = vmatmul.f32.gmra.mxu0 %v847
        %v891 = vpop.f32.mrf.mxu0
        %v892 = vadd.f32 0.0, %v891
        %893 = vmatmul.f32.gmra.mxu0 %v850
        %v894 = vpop.f32.mrf.mxu0
        %v895 = vadd.f32 0.0, %v894
        %896 = vmatmul.f32.gmra.mxu0 %v853
        %v897 = vpop.f32.mrf.mxu0
        %v898 = vadd.f32 0.0, %v897
        %899 = vmatmul.f32.gmra.mxu0 %v856
        %v900 = vpop.f32.mrf.mxu0
        %v901 = vadd.f32 0.0, %v900
        %902 = vmatmul.f32.gmra.mxu0 %v859
        %v903 = vpop.f32.mrf.mxu0
        %v904 = vadd.f32 0.0, %v903
        %905 = vdwg.mxu0
        %v906 = vld [vmem:[%s2] sm:$0x1]
        %v908 = vperm.slane %v906, 0
        %v910 = vmul.f32 %v883, %v908
        %v911 = vmul.f32 %v886, %v908
        %v912 = vmul.f32 %v889, %v908
        %v913 = vmul.f32 %v892, %v908
        %v914 = vmul.f32 %v895, %v908
        %v915 = vmul.f32 %v898, %v908
        %v916 = vmul.f32 %v901, %v908
        %v917 = vmul.f32 %v904, %v908
        %v918 = vld [vmem:[%s3] sm:$0x1]
        %v920 = vperm.slane %v918, 0
        %v922 = vadd.f32 %v910, %v920
        %v923 = vadd.f32 %v911, %v920
        %v924 = vadd.f32 %v912, %v920
        %v925 = vadd.f32 %v913, %v920
        %v926 = vadd.f32 %v914, %v920
        %v927 = vadd.f32 %v915, %v920
        %v928 = vadd.f32 %v916, %v920
        %v929 = vadd.f32 %v917, %v920
        %v930 = vmax.f32 %v922, 0.0
        %v931 = vmax.f32 %v923, 0.0
        %v932 = vmax.f32 %v924, 0.0
        %v933 = vmax.f32 %v925, 0.0
        %v934 = vmax.f32 %v926, 0.0
        %v935 = vmax.f32 %v927, 0.0
        %v936 = vmax.f32 %v928, 0.0
        %v937 = vmax.f32 %v929, 0.0
        %s938 = scalar_lea.vmem [#allocation4], 16
        %939 = vst [vmem:[%s938 + $0x1] sm:$0xff] %v930
        %940 = vst [vmem:[%s938 + $0x11] sm:$0xff] %v931
        %941 = vst [vmem:[%s938 + $0x21] sm:$0xff] %v932
        %942 = vst [vmem:[%s938 + $0x31] sm:$0xff] %v933
        %943 = vst [vmem:[%s938 + $0x41] sm:$0xff] %v934
        %944 = vst [vmem:[%s938 + $0x51] sm:$0xff] %v935
        %945 = vst [vmem:[%s938 + $0x61] sm:$0xff] %v936
        %946 = vst [vmem:[%s938 + $0x71] sm:$0xff] %v937
        %947 = vst [vmem:[#allocation4 + $0x1] sm:$0xff] %v931
        %s948 = scalar_lea.vmem [#allocation4], 144
        %949 = vst [vmem:[%s948 + $0x1] sm:$0xff] %v936
        %v950 = vld [vmem:[#allocation4 + $0x2] sm:$0x1]
        %v951 = vld [vmem:[#allocation4 + $0x12] sm:$0x1]
        %v952 = vld [vmem:[#allocation4 + $0x22] sm:$0x1]
        %v953 = vld [vmem:[#allocation4 + $0x32] sm:$0x1]
        %v954 = vld [vmem:[#allocation4 + $0x42] sm:$0x1]
        %v955 = vld [vmem:[#allocation4 + $0x52] sm:$0x1]
        %v956 = vld [vmem:[#allocation4 + $0x62] sm:$0x1]
        %v957 = vld [vmem:[#allocation4 + $0x72] sm:$0x1]
        %v958 = vld [vmem:[#allocation4 + $0x82] sm:$0x1]
        %v959 = vld [vmem:[#allocation4 + $0x92] sm:$0x1]
        %960 = vst [vmem:[#allocation4] sm:$0x1] %v950
        %961 = vst [vmem:[#allocation4 + $0x10] sm:$0x1] %v951
        %962 = vst [vmem:[#allocation4 + $0x20] sm:$0x1] %v952
        %963 = vst [vmem:[#allocation4 + $0x30] sm:$0x1] %v953
        %964 = vst [vmem:[#allocation4 + $0x40] sm:$0x1] %v954
        %965 = vst [vmem:[#allocation4 + $0x50] sm:$0x1] %v955
        %966 = vst [vmem:[#allocation4 + $0x60] sm:$0x1] %v956
        %967 = vst [vmem:[#allocation4 + $0x70] sm:$0x1] %v957
        %968 = vst [vmem:[#allocation4 + $0x80] sm:$0x1] %v958
        %969 = vst [vmem:[#allocation4 + $0x90] sm:$0x1] %v959
        %v970 = vld [vmem:[#allocation4 + $0x7] sm:$0x1]
        %v971 = vld [vmem:[#allocation4 + $0x17] sm:$0x1]
        %v972 = vld [vmem:[#allocation4 + $0x27] sm:$0x1]
        %v973 = vld [vmem:[#allocation4 + $0x37] sm:$0x1]
        %v974 = vld [vmem:[#allocation4 + $0x47] sm:$0x1]
        %v975 = vld [vmem:[#allocation4 + $0x57] sm:$0x1]
        %v976 = vld [vmem:[#allocation4 + $0x67] sm:$0x1]
        %v977 = vld [vmem:[#allocation4 + $0x77] sm:$0x1]
        %v978 = vld [vmem:[#allocation4 + $0x87] sm:$0x1]
        %v979 = vld [vmem:[#allocation4 + $0x97] sm:$0x1]
        %980 = vst [vmem:[#allocation4 + $0x9] sm:$0x1] %v970
        %981 = vst [vmem:[#allocation4 + $0x19] sm:$0x1] %v971
        %982 = vst [vmem:[#allocation4 + $0x29] sm:$0x1] %v972
        %983 = vst [vmem:[#allocation4 + $0x39] sm:$0x1] %v973
        %984 = vst [vmem:[#allocation4 + $0x49] sm:$0x1] %v974
        %985 = vst [vmem:[#allocation4 + $0x59] sm:$0x1] %v975
        %986 = vst [vmem:[#allocation4 + $0x69] sm:$0x1] %v976
        %987 = vst [vmem:[#allocation4 + $0x79] sm:$0x1] %v977
        %988 = vst [vmem:[#allocation4 + $0x89] sm:$0x1] %v978
        %989 = vst [vmem:[#allocation4 + $0x99] sm:$0x1] %v979
        %v990 = vld [vmem:[#allocation4] sm:$0xff]
        %v991 = vld [vmem:[#allocation4 + $0x10] sm:$0xff]
        %v992 = vld [vmem:[#allocation4 + $0x20] sm:$0xff]
        %v993 = vld [vmem:[#allocation4 + $0x30] sm:$0xff]
        %v994 = vld [vmem:[#allocation4 + $0x40] sm:$0xff]
        %v995 = vld [vmem:[#allocation4 + $0x50] sm:$0xff]
        %v996 = vld [vmem:[#allocation4 + $0x60] sm:$0xff]
        %v997 = vld [vmem:[#allocation4 + $0x70] sm:$0xff]
        %998 = vst [vmem:[#allocation5] sm:$0xff] %v990
        %999 = vst [vmem:[#allocation5 + $0x48] sm:$0xff] %v991
        %1000 = vst [vmem:[#allocation5 + $0x90] sm:$0xff] %v992
        %1001 = vst [vmem:[#allocation5 + $0xd8] sm:$0xff] %v993
        %1002 = vst [vmem:[#allocation5 + $0x120] sm:$0xff] %v994
        %1003 = vst [vmem:[#allocation5 + $0x168] sm:$0xff] %v995
        %1004 = vst [vmem:[#allocation5 + $0x1b0] sm:$0xff] %v996
        %1005 = vst [vmem:[#allocation5 + $0x1f8] sm:$0xff] %v997
        %v1006 = vld [vmem:[#allocation4 + $0x1] sm:$0xff]
        %v1007 = vld [vmem:[#allocation4 + $0x11] sm:$0xff]
        %v1008 = vld [vmem:[#allocation4 + $0x21] sm:$0xff]
        %v1009 = vld [vmem:[#allocation4 + $0x31] sm:$0xff]
        %v1010 = vld [vmem:[#allocation4 + $0x41] sm:$0xff]
        %v1011 = vld [vmem:[#allocation4 + $0x51] sm:$0xff]
        %v1012 = vld [vmem:[#allocation4 + $0x61] sm:$0xff]
        %v1013 = vld [vmem:[#allocation4 + $0x71] sm:$0xff]
        %1014 = vst [vmem:[#allocation5 + $0x8] sm:$0xff] %v1006
        %1015 = vst [vmem:[#allocation5 + $0x50] sm:$0xff] %v1007
        %1016 = vst [vmem:[#allocation5 + $0x98] sm:$0xff] %v1008
        %1017 = vst [vmem:[#allocation5 + $0xe0] sm:$0xff] %v1009
        %1018 = vst [vmem:[#allocation5 + $0x128] sm:$0xff] %v1010
        %1019 = vst [vmem:[#allocation5 + $0x170] sm:$0xff] %v1011
        %1020 = vst [vmem:[#allocation5 + $0x1b8] sm:$0xff] %v1012
        %1021 = vst [vmem:[#allocation5 + $0x200] sm:$0xff] %v1013
        %v1022 = vld [vmem:[#allocation4 + $0x2] sm:$0xff]
        %v1023 = vld [vmem:[#allocation4 + $0x12] sm:$0xff]
        %v1024 = vld [vmem:[#allocation4 + $0x22] sm:$0xff]
        %v1025 = vld [vmem:[#allocation4 + $0x32] sm:$0xff]
        %v1026 = vld [vmem:[#allocation4 + $0x42] sm:$0xff]
        %v1027 = vld [vmem:[#allocation4 + $0x52] sm:$0xff]
        %v1028 = vld [vmem:[#allocation4 + $0x62] sm:$0xff]
        %v1029 = vld [vmem:[#allocation4 + $0x72] sm:$0xff]
        %1030 = vst [vmem:[#allocation5 + $0x10] sm:$0xff] %v1022
        %1031 = vst [vmem:[#allocation5 + $0x58] sm:$0xff] %v1023
        %1032 = vst [vmem:[#allocation5 + $0xa0] sm:$0xff] %v1024
        %1033 = vst [vmem:[#allocation5 + $0xe8] sm:$0xff] %v1025
        %1034 = vst [vmem:[#allocation5 + $0x130] sm:$0xff] %v1026
        %1035 = vst [vmem:[#allocation5 + $0x178] sm:$0xff] %v1027
        %1036 = vst [vmem:[#allocation5 + $0x1c0] sm:$0xff] %v1028
        %1037 = vst [vmem:[#allocation5 + $0x208] sm:$0xff] %v1029
        %v1038 = vld [vmem:[%s938] sm:$0xff]
        %v1039 = vld [vmem:[%s938 + $0x10] sm:$0xff]
        %v1040 = vld [vmem:[%s938 + $0x20] sm:$0xff]
        %v1041 = vld [vmem:[%s938 + $0x30] sm:$0xff]
        %v1042 = vld [vmem:[%s938 + $0x40] sm:$0xff]
        %v1043 = vld [vmem:[%s938 + $0x50] sm:$0xff]
        %v1044 = vld [vmem:[%s938 + $0x60] sm:$0xff]
        %v1045 = vld [vmem:[%s938 + $0x70] sm:$0xff]
        %1046 = vst [vmem:[#allocation5 + $0x18] sm:$0xff] %v1038
        %1047 = vst [vmem:[#allocation5 + $0x60] sm:$0xff] %v1039
        %1048 = vst [vmem:[#allocation5 + $0xa8] sm:$0xff] %v1040
        %1049 = vst [vmem:[#allocation5 + $0xf0] sm:$0xff] %v1041
        %1050 = vst [vmem:[#allocation5 + $0x138] sm:$0xff] %v1042
        %1051 = vst [vmem:[#allocation5 + $0x180] sm:$0xff] %v1043
        %1052 = vst [vmem:[#allocation5 + $0x1c8] sm:$0xff] %v1044
        %1053 = vst [vmem:[#allocation5 + $0x210] sm:$0xff] %v1045
        %v1054 = vld [vmem:[%s938 + $0x1] sm:$0xff]
        %v1055 = vld [vmem:[%s938 + $0x11] sm:$0xff]
        %v1056 = vld [vmem:[%s938 + $0x21] sm:$0xff]
        %v1057 = vld [vmem:[%s938 + $0x31] sm:$0xff]
        %v1058 = vld [vmem:[%s938 + $0x41] sm:$0xff]
        %v1059 = vld [vmem:[%s938 + $0x51] sm:$0xff]
        %v1060 = vld [vmem:[%s938 + $0x61] sm:$0xff]
        %v1061 = vld [vmem:[%s938 + $0x71] sm:$0xff]
        %1062 = vst [vmem:[#allocation5 + $0x20] sm:$0xff] %v1054
        %1063 = vst [vmem:[#allocation5 + $0x68] sm:$0xff] %v1055
        %1064 = vst [vmem:[#allocation5 + $0xb0] sm:$0xff] %v1056
        %1065 = vst [vmem:[#allocation5 + $0xf8] sm:$0xff] %v1057
        %1066 = vst [vmem:[#allocation5 + $0x140] sm:$0xff] %v1058
        %1067 = vst [vmem:[#allocation5 + $0x188] sm:$0xff] %v1059
        %1068 = vst [vmem:[#allocation5 + $0x1d0] sm:$0xff] %v1060
        %1069 = vst [vmem:[#allocation5 + $0x218] sm:$0xff] %v1061
        %v1070 = vld [vmem:[%s938 + $0x2] sm:$0xff]
        %v1071 = vld [vmem:[%s938 + $0x12] sm:$0xff]
        %v1072 = vld [vmem:[%s938 + $0x22] sm:$0xff]
        %v1073 = vld [vmem:[%s938 + $0x32] sm:$0xff]
        %v1074 = vld [vmem:[%s938 + $0x42] sm:$0xff]
        %v1075 = vld [vmem:[%s938 + $0x52] sm:$0xff]
        %v1076 = vld [vmem:[%s938 + $0x62] sm:$0xff]
        %v1077 = vld [vmem:[%s938 + $0x72] sm:$0xff]
        %1078 = vst [vmem:[#allocation5 + $0x28] sm:$0xff] %v1070
        %1079 = vst [vmem:[#allocation5 + $0x70] sm:$0xff] %v1071
        %1080 = vst [vmem:[#allocation5 + $0xb8] sm:$0xff] %v1072
        %1081 = vst [vmem:[#allocation5 + $0x100] sm:$0xff] %v1073
        %1082 = vst [vmem:[#allocation5 + $0x148] sm:$0xff] %v1074
        %1083 = vst [vmem:[#allocation5 + $0x190] sm:$0xff] %v1075
        %1084 = vst [vmem:[#allocation5 + $0x1d8] sm:$0xff] %v1076
        %1085 = vst [vmem:[#allocation5 + $0x220] sm:$0xff] %v1077
        %s1086 = scalar_lea.vmem [#allocation4], 32
        %v1087 = vld [vmem:[%s1086] sm:$0xff]
        %v1088 = vld [vmem:[%s1086 + $0x10] sm:$0xff]
        %v1089 = vld [vmem:[%s1086 + $0x20] sm:$0xff]
        %v1090 = vld [vmem:[%s1086 + $0x30] sm:$0xff]
        %v1091 = vld [vmem:[%s1086 + $0x40] sm:$0xff]
        %v1092 = vld [vmem:[%s1086 + $0x50] sm:$0xff]
        %v1093 = vld [vmem:[%s1086 + $0x60] sm:$0xff]
        %v1094 = vld [vmem:[%s1086 + $0x70] sm:$0xff]
        %1095 = vst [vmem:[#allocation5 + $0x30] sm:$0xff] %v1087
        %1096 = vst [vmem:[#allocation5 + $0x78] sm:$0xff] %v1088
        %1097 = vst [vmem:[#allocation5 + $0xc0] sm:$0xff] %v1089
        %1098 = vst [vmem:[#allocation5 + $0x108] sm:$0xff] %v1090
        %1099 = vst [vmem:[#allocation5 + $0x150] sm:$0xff] %v1091
        %1100 = vst [vmem:[#allocation5 + $0x198] sm:$0xff] %v1092
        %1101 = vst [vmem:[#allocation5 + $0x1e0] sm:$0xff] %v1093
        %1102 = vst [vmem:[#allocation5 + $0x228] sm:$0xff] %v1094
        %v1103 = vld [vmem:[%s1086 + $0x1] sm:$0xff]
        %v1104 = vld [vmem:[%s1086 + $0x11] sm:$0xff]
        %v1105 = vld [vmem:[%s1086 + $0x21] sm:$0xff]
        %v1106 = vld [vmem:[%s1086 + $0x31] sm:$0xff]
        %v1107 = vld [vmem:[%s1086 + $0x41] sm:$0xff]
        %v1108 = vld [vmem:[%s1086 + $0x51] sm:$0xff]
        %v1109 = vld [vmem:[%s1086 + $0x61] sm:$0xff]
        %v1110 = vld [vmem:[%s1086 + $0x71] sm:$0xff]
        %1111 = vst [vmem:[#allocation5 + $0x38] sm:$0xff] %v1103
        %1112 = vst [vmem:[#allocation5 + $0x80] sm:$0xff] %v1104
        %1113 = vst [vmem:[#allocation5 + $0xc8] sm:$0xff] %v1105
        %1114 = vst [vmem:[#allocation5 + $0x110] sm:$0xff] %v1106
        %1115 = vst [vmem:[#allocation5 + $0x158] sm:$0xff] %v1107
        %1116 = vst [vmem:[#allocation5 + $0x1a0] sm:$0xff] %v1108
        %1117 = vst [vmem:[#allocation5 + $0x1e8] sm:$0xff] %v1109
        %1118 = vst [vmem:[#allocation5 + $0x230] sm:$0xff] %v1110
        %v1119 = vld [vmem:[%s1086 + $0x2] sm:$0xff]
        %v1120 = vld [vmem:[%s1086 + $0x12] sm:$0xff]
        %v1121 = vld [vmem:[%s1086 + $0x22] sm:$0xff]
        %v1122 = vld [vmem:[%s1086 + $0x32] sm:$0xff]
        %v1123 = vld [vmem:[%s1086 + $0x42] sm:$0xff]
        %v1124 = vld [vmem:[%s1086 + $0x52] sm:$0xff]
        %v1125 = vld [vmem:[%s1086 + $0x62] sm:$0xff]
        %v1126 = vld [vmem:[%s1086 + $0x72] sm:$0xff]
        %1127 = vst [vmem:[#allocation5 + $0x40] sm:$0xff] %v1119
        %1128 = vst [vmem:[#allocation5 + $0x88] sm:$0xff] %v1120
        %1129 = vst [vmem:[#allocation5 + $0xd0] sm:$0xff] %v1121
        %1130 = vst [vmem:[#allocation5 + $0x118] sm:$0xff] %v1122
        %1131 = vst [vmem:[#allocation5 + $0x160] sm:$0xff] %v1123
        %1132 = vst [vmem:[#allocation5 + $0x1a8] sm:$0xff] %v1124
        %1133 = vst [vmem:[#allocation5 + $0x1f0] sm:$0xff] %v1125
        %1134 = vst [vmem:[#allocation5 + $0x238] sm:$0xff] %v1126
        %v1135 = vld [vmem:[#allocation5] sm:$0xff]
        %v1136 = vld [vmem:[#allocation5 + $0x8] sm:$0xff]
        %v1137 = vld [vmem:[#allocation5 + $0x10] sm:$0xff]
        %v1138 = vld [vmem:[#allocation5 + $0x18] sm:$0xff]
        %v1139 = vld [vmem:[#allocation5 + $0x20] sm:$0xff]
        %v1140 = vld [vmem:[#allocation5 + $0x28] sm:$0xff]
        %v1141 = vld [vmem:[#allocation5 + $0x30] sm:$0xff]
        %v1142 = vld [vmem:[#allocation5 + $0x38] sm:$0xff]
        %v1143 = vld [vmem:[#allocation5 + $0x40] sm:$0xff]
        %v1144 = vld [vmem:[#allocation5 + $0x48] sm:$0xff]
        %v1145 = vld [vmem:[#allocation5 + $0x50] sm:$0xff]
        %v1146 = vld [vmem:[#allocation5 + $0x58] sm:$0xff]
        %v1147 = vld [vmem:[#allocation5 + $0x60] sm:$0xff]
        %v1148 = vld [vmem:[#allocation5 + $0x68] sm:$0xff]
        %v1149 = vld [vmem:[#allocation5 + $0x70] sm:$0xff]
        %v1150 = vld [vmem:[#allocation5 + $0x78] sm:$0xff]
        %v1151 = vld [vmem:[#allocation5 + $0x80] sm:$0xff]
        %v1152 = vld [vmem:[#allocation5 + $0x88] sm:$0xff]
        %v1153 = vld [vmem:[#allocation5 + $0x90] sm:$0xff]
        %v1154 = vld [vmem:[#allocation5 + $0x98] sm:$0xff]
        %v1155 = vld [vmem:[#allocation5 + $0xa0] sm:$0xff]
        %v1156 = vld [vmem:[#allocation5 + $0xa8] sm:$0xff]
        %v1157 = vld [vmem:[#allocation5 + $0xb0] sm:$0xff]
        %v1158 = vld [vmem:[#allocation5 + $0xb8] sm:$0xff]
        %v1159 = vld [vmem:[#allocation5 + $0xc0] sm:$0xff]
        %v1160 = vld [vmem:[#allocation5 + $0xc8] sm:$0xff]
        %v1161 = vld [vmem:[#allocation5 + $0xd0] sm:$0xff]
        %v1162 = vld [vmem:[#allocation5 + $0xd8] sm:$0xff]
        %v1163 = vld [vmem:[#allocation5 + $0xe0] sm:$0xff]
        %v1164 = vld [vmem:[#allocation5 + $0xe8] sm:$0xff]
        %v1165 = vld [vmem:[#allocation5 + $0xf0] sm:$0xff]
        %v1166 = vld [vmem:[#allocation5 + $0xf8] sm:$0xff]
        %v1167 = vld [vmem:[#allocation5 + $0x100] sm:$0xff]
        %v1168 = vld [vmem:[#allocation5 + $0x108] sm:$0xff]
        %v1169 = vld [vmem:[#allocation5 + $0x110] sm:$0xff]
        %v1170 = vld [vmem:[#allocation5 + $0x118] sm:$0xff]
        %v1171 = vld [vmem:[#allocation5 + $0x120] sm:$0xff]
        %v1172 = vld [vmem:[#allocation5 + $0x128] sm:$0xff]
        %v1173 = vld [vmem:[#allocation5 + $0x130] sm:$0xff]
        %v1174 = vld [vmem:[#allocation5 + $0x138] sm:$0xff]
        %v1175 = vld [vmem:[#allocation5 + $0x140] sm:$0xff]
        %v1176 = vld [vmem:[#allocation5 + $0x148] sm:$0xff]
        %v1177 = vld [vmem:[#allocation5 + $0x150] sm:$0xff]
        %v1178 = vld [vmem:[#allocation5 + $0x158] sm:$0xff]
        %v1179 = vld [vmem:[#allocation5 + $0x160] sm:$0xff]
        %v1180 = vld [vmem:[#allocation5 + $0x168] sm:$0xff]
        %v1181 = vld [vmem:[#allocation5 + $0x170] sm:$0xff]
        %v1182 = vld [vmem:[#allocation5 + $0x178] sm:$0xff]
        %v1183 = vld [vmem:[#allocation5 + $0x180] sm:$0xff]
        %v1184 = vld [vmem:[#allocation5 + $0x188] sm:$0xff]
        %v1185 = vld [vmem:[#allocation5 + $0x190] sm:$0xff]
        %v1186 = vld [vmem:[#allocation5 + $0x198] sm:$0xff]
        %v1187 = vld [vmem:[#allocation5 + $0x1a0] sm:$0xff]
        %v1188 = vld [vmem:[#allocation5 + $0x1a8] sm:$0xff]
        %v1189 = vld [vmem:[#allocation5 + $0x1b0] sm:$0xff]
        %v1190 = vld [vmem:[#allocation5 + $0x1b8] sm:$0xff]
        %v1191 = vld [vmem:[#allocation5 + $0x1c0] sm:$0xff]
        %v1192 = vld [vmem:[#allocation5 + $0x1c8] sm:$0xff]
        %v1193 = vld [vmem:[#allocation5 + $0x1d0] sm:$0xff]
        %v1194 = vld [vmem:[#allocation5 + $0x1d8] sm:$0xff]
        %v1195 = vld [vmem:[#allocation5 + $0x1e0] sm:$0xff]
        %v1196 = vld [vmem:[#allocation5 + $0x1e8] sm:$0xff]
        %v1197 = vld [vmem:[#allocation5 + $0x1f0] sm:$0xff]
        %v1198 = vld [vmem:[#allocation5 + $0x1f8] sm:$0xff]
        %v1199 = vld [vmem:[#allocation5 + $0x200] sm:$0xff]
        %v1200 = vld [vmem:[#allocation5 + $0x208] sm:$0xff]
        %v1201 = vld [vmem:[#allocation5 + $0x210] sm:$0xff]
        %v1202 = vld [vmem:[#allocation5 + $0x218] sm:$0xff]
        %v1203 = vld [vmem:[#allocation5 + $0x220] sm:$0xff]
        %v1204 = vld [vmem:[#allocation5 + $0x228] sm:$0xff]
        %v1205 = vld [vmem:[#allocation5 + $0x230] sm:$0xff]
        %v1206 = vld [vmem:[#allocation5 + $0x238] sm:$0xff]
        %v1207 = vld [vmem:[#allocation6] sm:$0xff]
        %v1208 = vld [vmem:[#allocation6 + $0x8] sm:$0xff]
        %v1209 = vld [vmem:[#allocation6 + $0x10] sm:$0xff]
        %v1210 = vld [vmem:[#allocation6 + $0x18] sm:$0xff]
        %v1211 = vld [vmem:[#allocation6 + $0x20] sm:$0xff]
        %v1212 = vld [vmem:[#allocation6 + $0x28] sm:$0xff]
        %v1213 = vld [vmem:[#allocation6 + $0x30] sm:$0xff]
        %v1214 = vld [vmem:[#allocation6 + $0x38] sm:$0xff]
        %v1215 = vld [vmem:[#allocation6 + $0x40] sm:$0xff]
        %v1216 = vld [vmem:[#allocation6 + $0x48] sm:$0xff]
        %v1217 = vld [vmem:[#allocation6 + $0x50] sm:$0xff]
        %v1218 = vld [vmem:[#allocation6 + $0x58] sm:$0xff]
        %v1219 = vld [vmem:[#allocation6 + $0x60] sm:$0xff]
        %v1220 = vld [vmem:[#allocation6 + $0x68] sm:$0xff]
        %v1221 = vld [vmem:[#allocation6 + $0x70] sm:$0xff]
        %v1222 = vld [vmem:[#allocation6 + $0x78] sm:$0xff]
        %v1223 = vld [vmem:[#allocation6 + $0x80] sm:$0xff]
        %v1224 = vld [vmem:[#allocation6 + $0x88] sm:$0xff]
        %v1225 = vld [vmem:[#allocation6 + $0x90] sm:$0xff]
        %v1226 = vld [vmem:[#allocation6 + $0x98] sm:$0xff]
        %v1227 = vld [vmem:[#allocation6 + $0xa0] sm:$0xff]
        %v1228 = vld [vmem:[#allocation6 + $0xa8] sm:$0xff]
        %v1229 = vld [vmem:[#allocation6 + $0xb0] sm:$0xff]
        %v1230 = vld [vmem:[#allocation6 + $0xb8] sm:$0xff]
        %v1231 = vld [vmem:[#allocation6 + $0xc0] sm:$0xff]
        %v1232 = vld [vmem:[#allocation6 + $0xc8] sm:$0xff]
        %v1233 = vld [vmem:[#allocation6 + $0xd0] sm:$0xff]
        %v1234 = vld [vmem:[#allocation6 + $0xd8] sm:$0xff]
        %v1235 = vld [vmem:[#allocation6 + $0xe0] sm:$0xff]
        %v1236 = vld [vmem:[#allocation6 + $0xe8] sm:$0xff]
        %v1237 = vld [vmem:[#allocation6 + $0xf0] sm:$0xff]
        %v1238 = vld [vmem:[#allocation6 + $0xf8] sm:$0xff]
        %v1239 = vld [vmem:[#allocation6 + $0x100] sm:$0xff]
        %v1240 = vld [vmem:[#allocation6 + $0x108] sm:$0xff]
        %v1241 = vld [vmem:[#allocation6 + $0x110] sm:$0xff]
        %v1242 = vld [vmem:[#allocation6 + $0x118] sm:$0xff]
        %v1243 = vld [vmem:[#allocation6 + $0x120] sm:$0xff]
        %v1244 = vld [vmem:[#allocation6 + $0x128] sm:$0xff]
        %v1245 = vld [vmem:[#allocation6 + $0x130] sm:$0xff]
        %v1246 = vld [vmem:[#allocation6 + $0x138] sm:$0xff]
        %v1247 = vld [vmem:[#allocation6 + $0x140] sm:$0xff]
        %v1248 = vld [vmem:[#allocation6 + $0x148] sm:$0xff]
        %v1249 = vld [vmem:[#allocation6 + $0x150] sm:$0xff]
        %v1250 = vld [vmem:[#allocation6 + $0x158] sm:$0xff]
        %v1251 = vld [vmem:[#allocation6 + $0x160] sm:$0xff]
        %v1252 = vld [vmem:[#allocation6 + $0x168] sm:$0xff]
        %v1253 = vld [vmem:[#allocation6 + $0x170] sm:$0xff]
        %v1254 = vld [vmem:[#allocation6 + $0x178] sm:$0xff]
        %v1255 = vld [vmem:[#allocation6 + $0x180] sm:$0xff]
        %v1256 = vld [vmem:[#allocation6 + $0x188] sm:$0xff]
        %v1257 = vld [vmem:[#allocation6 + $0x190] sm:$0xff]
        %v1258 = vld [vmem:[#allocation6 + $0x198] sm:$0xff]
        %v1259 = vld [vmem:[#allocation6 + $0x1a0] sm:$0xff]
        %v1260 = vld [vmem:[#allocation6 + $0x1a8] sm:$0xff]
        %v1261 = vld [vmem:[#allocation6 + $0x1b0] sm:$0xff]
        %v1262 = vld [vmem:[#allocation6 + $0x1b8] sm:$0xff]
        %v1263 = vld [vmem:[#allocation6 + $0x1c0] sm:$0xff]
        %v1264 = vld [vmem:[#allocation6 + $0x1c8] sm:$0xff]
        %v1265 = vld [vmem:[#allocation6 + $0x1d0] sm:$0xff]
        %v1266 = vld [vmem:[#allocation6 + $0x1d8] sm:$0xff]
        %v1267 = vld [vmem:[#allocation6 + $0x1e0] sm:$0xff]
        %v1268 = vld [vmem:[#allocation6 + $0x1e8] sm:$0xff]
        %v1269 = vld [vmem:[#allocation6 + $0x1f0] sm:$0xff]
        %v1270 = vld [vmem:[#allocation6 + $0x1f8] sm:$0xff]
        %v1271 = vld [vmem:[#allocation6 + $0x200] sm:$0xff]
        %v1272 = vld [vmem:[#allocation6 + $0x208] sm:$0xff]
        %v1273 = vld [vmem:[#allocation6 + $0x210] sm:$0xff]
        %v1274 = vld [vmem:[#allocation6 + $0x218] sm:$0xff]
        %v1275 = vld [vmem:[#allocation6 + $0x220] sm:$0xff]
        %v1276 = vld [vmem:[#allocation6 + $0x228] sm:$0xff]
        %v1277 = vld [vmem:[#allocation6 + $0x230] sm:$0xff]
        %v1278 = vld [vmem:[#allocation6 + $0x238] sm:$0xff]
        %v1279 = vld [vmem:[#allocation6 + $0x240] sm:$0xff]
        %v1280 = vld [vmem:[#allocation6 + $0x248] sm:$0xff]
        %v1281 = vld [vmem:[#allocation6 + $0x250] sm:$0xff]
        %v1282 = vld [vmem:[#allocation6 + $0x258] sm:$0xff]
        %v1283 = vld [vmem:[#allocation6 + $0x260] sm:$0xff]
        %v1284 = vld [vmem:[#allocation6 + $0x268] sm:$0xff]
        %v1285 = vld [vmem:[#allocation6 + $0x270] sm:$0xff]
        %v1286 = vld [vmem:[#allocation6 + $0x278] sm:$0xff]
        %v1287 = vld [vmem:[#allocation6 + $0x280] sm:$0xff]
        %v1288 = vld [vmem:[#allocation6 + $0x288] sm:$0xff]
        %v1289 = vld [vmem:[#allocation6 + $0x290] sm:$0xff]
        %v1290 = vld [vmem:[#allocation6 + $0x298] sm:$0xff]
        %v1291 = vld [vmem:[#allocation6 + $0x2a0] sm:$0xff]
        %v1292 = vld [vmem:[#allocation6 + $0x2a8] sm:$0xff]
        %v1293 = vld [vmem:[#allocation6 + $0x2b0] sm:$0xff]
        %v1294 = vld [vmem:[#allocation6 + $0x2b8] sm:$0xff]
        %v1295 = vld [vmem:[#allocation6 + $0x2c0] sm:$0xff]
        %v1296 = vld [vmem:[#allocation6 + $0x2c8] sm:$0xff]
        %v1297 = vld [vmem:[#allocation6 + $0x2d0] sm:$0xff]
        %v1298 = vld [vmem:[#allocation6 + $0x2d8] sm:$0xff]
        %v1299 = vld [vmem:[#allocation6 + $0x2e0] sm:$0xff]
        %v1300 = vld [vmem:[#allocation6 + $0x2e8] sm:$0xff]
        %v1301 = vld [vmem:[#allocation6 + $0x2f0] sm:$0xff]
        %v1302 = vld [vmem:[#allocation6 + $0x2f8] sm:$0xff]
        %v1303 = vld [vmem:[#allocation6 + $0x300] sm:$0xff]
        %v1304 = vld [vmem:[#allocation6 + $0x308] sm:$0xff]
        %v1305 = vld [vmem:[#allocation6 + $0x310] sm:$0xff]
        %v1306 = vld [vmem:[#allocation6 + $0x318] sm:$0xff]
        %v1307 = vld [vmem:[#allocation6 + $0x320] sm:$0xff]
        %v1308 = vld [vmem:[#allocation6 + $0x328] sm:$0xff]
        %v1309 = vld [vmem:[#allocation6 + $0x330] sm:$0xff]
        %v1310 = vld [vmem:[#allocation6 + $0x338] sm:$0xff]
        %v1311 = vld [vmem:[#allocation6 + $0x340] sm:$0xff]
        %v1312 = vld [vmem:[#allocation6 + $0x348] sm:$0xff]
        %v1313 = vld [vmem:[#allocation6 + $0x350] sm:$0xff]
        %v1314 = vld [vmem:[#allocation6 + $0x358] sm:$0xff]
        %v1315 = vld [vmem:[#allocation6 + $0x360] sm:$0xff]
        %v1316 = vld [vmem:[#allocation6 + $0x368] sm:$0xff]
        %v1317 = vld [vmem:[#allocation6 + $0x370] sm:$0xff]
        %v1318 = vld [vmem:[#allocation6 + $0x378] sm:$0xff]
        %v1319 = vld [vmem:[#allocation6 + $0x380] sm:$0xff]
        %v1320 = vld [vmem:[#allocation6 + $0x388] sm:$0xff]
        %v1321 = vld [vmem:[#allocation6 + $0x390] sm:$0xff]
        %v1322 = vld [vmem:[#allocation6 + $0x398] sm:$0xff]
        %v1323 = vld [vmem:[#allocation6 + $0x3a0] sm:$0xff]
        %v1324 = vld [vmem:[#allocation6 + $0x3a8] sm:$0xff]
        %v1325 = vld [vmem:[#allocation6 + $0x3b0] sm:$0xff]
        %v1326 = vld [vmem:[#allocation6 + $0x3b8] sm:$0xff]
        %v1327 = vld [vmem:[#allocation6 + $0x3c0] sm:$0xff]
        %v1328 = vld [vmem:[#allocation6 + $0x3c8] sm:$0xff]
        %v1329 = vld [vmem:[#allocation6 + $0x3d0] sm:$0xff]
        %v1330 = vld [vmem:[#allocation6 + $0x3d8] sm:$0xff]
        %v1331 = vld [vmem:[#allocation6 + $0x3e0] sm:$0xff]
        %v1332 = vld [vmem:[#allocation6 + $0x3e8] sm:$0xff]
        %v1333 = vld [vmem:[#allocation6 + $0x3f0] sm:$0xff]
        %v1334 = vld [vmem:[#allocation6 + $0x3f8] sm:$0xff]
        %v1335 = vld [vmem:[#allocation6 + $0x400] sm:$0xff]
        %v1336 = vld [vmem:[#allocation6 + $0x408] sm:$0xff]
        %v1337 = vld [vmem:[#allocation6 + $0x410] sm:$0xff]
        %v1338 = vld [vmem:[#allocation6 + $0x418] sm:$0xff]
        %v1339 = vld [vmem:[#allocation6 + $0x420] sm:$0xff]
        %v1340 = vld [vmem:[#allocation6 + $0x428] sm:$0xff]
        %v1341 = vld [vmem:[#allocation6 + $0x430] sm:$0xff]
        %v1342 = vld [vmem:[#allocation6 + $0x438] sm:$0xff]
        %v1343 = vld [vmem:[#allocation6 + $0x440] sm:$0xff]
        %v1344 = vld [vmem:[#allocation6 + $0x448] sm:$0xff]
        %v1345 = vld [vmem:[#allocation6 + $0x450] sm:$0xff]
        %v1346 = vld [vmem:[#allocation6 + $0x458] sm:$0xff]
        %v1347 = vld [vmem:[#allocation6 + $0x460] sm:$0xff]
        %v1348 = vld [vmem:[#allocation6 + $0x468] sm:$0xff]
        %v1349 = vld [vmem:[#allocation6 + $0x470] sm:$0xff]
        %v1350 = vld [vmem:[#allocation6 + $0x478] sm:$0xff]
        %1351 = vmatpush.msra.mxu0 %v1222
        %1352 = vmatpush.msra.mxu0 %v1221
        %1353 = vmatpush.msra.mxu0 %v1220
        %1354 = vmatpush.msra.mxu0 %v1219
        %1355 = vmatpush.msra.mxu0 %v1218
        %1356 = vmatpush.msra.mxu0 %v1217
        %1357 = vmatpush.msra.mxu0 %v1216
        %1358 = vmatpush.msra.mxu0 %v1215
        %1359 = vmatpush.msra.mxu0 %v1214
        %1360 = vmatpush.msra.mxu0 %v1213
        %1361 = vmatpush.msra.mxu0 %v1212
        %1362 = vmatpush.msra.mxu0 %v1211
        %1363 = vmatpush.msra.mxu0 %v1210
        %1364 = vmatpush.msra.mxu0 %v1209
        %1365 = vmatpush.msra.mxu0 %v1208
        %1366 = vmatpush.msra.mxu0 %v1207
        %1367 = vmatmul.f32.gmra.mxu0 %v1135
        %v1368 = vpop.f32.mrf.mxu0
        %v1369 = vadd.f32 0.0, %v1368
        %1370 = vmatmul.f32.gmra.mxu0 %v1144
        %v1371 = vpop.f32.mrf.mxu0
        %v1372 = vadd.f32 0.0, %v1371
        %1373 = vmatmul.f32.gmra.mxu0 %v1153
        %v1374 = vpop.f32.mrf.mxu0
        %v1375 = vadd.f32 0.0, %v1374
        %1376 = vmatmul.f32.gmra.mxu0 %v1162
        %v1377 = vpop.f32.mrf.mxu0
        %v1378 = vadd.f32 0.0, %v1377
        %1379 = vmatmul.f32.gmra.mxu0 %v1171
        %v1380 = vpop.f32.mrf.mxu0
        %v1381 = vadd.f32 0.0, %v1380
        %1382 = vmatmul.f32.gmra.mxu0 %v1180
        %v1383 = vpop.f32.mrf.mxu0
        %v1384 = vadd.f32 0.0, %v1383
        %1385 = vmatmul.f32.gmra.mxu0 %v1189
        %v1386 = vpop.f32.mrf.mxu0
        %v1387 = vadd.f32 0.0, %v1386
        %1388 = vmatmul.f32.gmra.mxu0 %v1198
        %v1389 = vpop.f32.mrf.mxu0
        %v1390 = vadd.f32 0.0, %v1389
        %1391 = vdwg.mxu0
        %1392 = vmatpush.msra.mxu0 %v1238
        %1393 = vmatpush.msra.mxu0 %v1237
        %1394 = vmatpush.msra.mxu0 %v1236
        %1395 = vmatpush.msra.mxu0 %v1235
        %1396 = vmatpush.msra.mxu0 %v1234
        %1397 = vmatpush.msra.mxu0 %v1233
        %1398 = vmatpush.msra.mxu0 %v1232
        %1399 = vmatpush.msra.mxu0 %v1231
        %1400 = vmatpush.msra.mxu0 %v1230
        %1401 = vmatpush.msra.mxu0 %v1229
        %1402 = vmatpush.msra.mxu0 %v1228
        %1403 = vmatpush.msra.mxu0 %v1227
        %1404 = vmatpush.msra.mxu0 %v1226
        %1405 = vmatpush.msra.mxu0 %v1225
        %1406 = vmatpush.msra.mxu0 %v1224
        %1407 = vmatpush.msra.mxu0 %v1223
        %1408 = vmatmul.f32.gmra.mxu0 %v1136
        %v1409 = vpop.f32.mrf.mxu0
        %v1410 = vadd.f32 %v1369, %v1409
        %1411 = vmatmul.f32.gmra.mxu0 %v1145
        %v1412 = vpop.f32.mrf.mxu0
        %v1413 = vadd.f32 %v1372, %v1412
        %1414 = vmatmul.f32.gmra.mxu0 %v1154
        %v1415 = vpop.f32.mrf.mxu0
        %v1416 = vadd.f32 %v1375, %v1415
        %1417 = vmatmul.f32.gmra.mxu0 %v1163
        %v1418 = vpop.f32.mrf.mxu0
        %v1419 = vadd.f32 %v1378, %v1418
        %1420 = vmatmul.f32.gmra.mxu0 %v1172
        %v1421 = vpop.f32.mrf.mxu0
        %v1422 = vadd.f32 %v1381, %v1421
        %1423 = vmatmul.f32.gmra.mxu0 %v1181
        %v1424 = vpop.f32.mrf.mxu0
        %v1425 = vadd.f32 %v1384, %v1424
        %1426 = vmatmul.f32.gmra.mxu0 %v1190
        %v1427 = vpop.f32.mrf.mxu0
        %v1428 = vadd.f32 %v1387, %v1427
        %1429 = vmatmul.f32.gmra.mxu0 %v1199
        %v1430 = vpop.f32.mrf.mxu0
        %v1431 = vadd.f32 %v1390, %v1430
        %1432 = vdwg.mxu0
        %1433 = vmatpush.msra.mxu0 %v1254
        %1434 = vmatpush.msra.mxu0 %v1253
        %1435 = vmatpush.msra.mxu0 %v1252
        %1436 = vmatpush.msra.mxu0 %v1251
        %1437 = vmatpush.msra.mxu0 %v1250
        %1438 = vmatpush.msra.mxu0 %v1249
        %1439 = vmatpush.msra.mxu0 %v1248
        %1440 = vmatpush.msra.mxu0 %v1247
        %1441 = vmatpush.msra.mxu0 %v1246
        %1442 = vmatpush.msra.mxu0 %v1245
        %1443 = vmatpush.msra.mxu0 %v1244
        %1444 = vmatpush.msra.mxu0 %v1243
        %1445 = vmatpush.msra.mxu0 %v1242
        %1446 = vmatpush.msra.mxu0 %v1241
        %1447 = vmatpush.msra.mxu0 %v1240
        %1448 = vmatpush.msra.mxu0 %v1239
        %1449 = vmatmul.f32.gmra.mxu0 %v1137
        %v1450 = vpop.f32.mrf.mxu0
        %v1451 = vadd.f32 %v1410, %v1450
        %1452 = vmatmul.f32.gmra.mxu0 %v1146
        %v1453 = vpop.f32.mrf.mxu0
        %v1454 = vadd.f32 %v1413, %v1453
        %1455 = vmatmul.f32.gmra.mxu0 %v1155
        %v1456 = vpop.f32.mrf.mxu0
        %v1457 = vadd.f32 %v1416, %v1456
        %1458 = vmatmul.f32.gmra.mxu0 %v1164
        %v1459 = vpop.f32.mrf.mxu0
        %v1460 = vadd.f32 %v1419, %v1459
        %1461 = vmatmul.f32.gmra.mxu0 %v1173
        %v1462 = vpop.f32.mrf.mxu0
        %v1463 = vadd.f32 %v1422, %v1462
        %1464 = vmatmul.f32.gmra.mxu0 %v1182
        %v1465 = vpop.f32.mrf.mxu0
        %v1466 = vadd.f32 %v1425, %v1465
        %1467 = vmatmul.f32.gmra.mxu0 %v1191
        %v1468 = vpop.f32.mrf.mxu0
        %v1469 = vadd.f32 %v1428, %v1468
        %1470 = vmatmul.f32.gmra.mxu0 %v1200
        %v1471 = vpop.f32.mrf.mxu0
        %v1472 = vadd.f32 %v1431, %v1471
        %1473 = vdwg.mxu0
        %1474 = vmatpush.msra.mxu0 %v1270
        %1475 = vmatpush.msra.mxu0 %v1269
        %1476 = vmatpush.msra.mxu0 %v1268
        %1477 = vmatpush.msra.mxu0 %v1267
        %1478 = vmatpush.msra.mxu0 %v1266
        %1479 = vmatpush.msra.mxu0 %v1265
        %1480 = vmatpush.msra.mxu0 %v1264
        %1481 = vmatpush.msra.mxu0 %v1263
        %1482 = vmatpush.msra.mxu0 %v1262
        %1483 = vmatpush.msra.mxu0 %v1261
        %1484 = vmatpush.msra.mxu0 %v1260
        %1485 = vmatpush.msra.mxu0 %v1259
        %1486 = vmatpush.msra.mxu0 %v1258
        %1487 = vmatpush.msra.mxu0 %v1257
        %1488 = vmatpush.msra.mxu0 %v1256
        %1489 = vmatpush.msra.mxu0 %v1255
        %1490 = vmatmul.f32.gmra.mxu0 %v1138
        %v1491 = vpop.f32.mrf.mxu0
        %v1492 = vadd.f32 %v1451, %v1491
        %1493 = vmatmul.f32.gmra.mxu0 %v1147
        %v1494 = vpop.f32.mrf.mxu0
        %v1495 = vadd.f32 %v1454, %v1494
        %1496 = vmatmul.f32.gmra.mxu0 %v1156
        %v1497 = vpop.f32.mrf.mxu0
        %v1498 = vadd.f32 %v1457, %v1497
        %1499 = vmatmul.f32.gmra.mxu0 %v1165
        %v1500 = vpop.f32.mrf.mxu0
        %v1501 = vadd.f32 %v1460, %v1500
        %1502 = vmatmul.f32.gmra.mxu0 %v1174
        %v1503 = vpop.f32.mrf.mxu0
        %v1504 = vadd.f32 %v1463, %v1503
        %1505 = vmatmul.f32.gmra.mxu0 %v1183
        %v1506 = vpop.f32.mrf.mxu0
        %v1507 = vadd.f32 %v1466, %v1506
        %1508 = vmatmul.f32.gmra.mxu0 %v1192
        %v1509 = vpop.f32.mrf.mxu0
        %v1510 = vadd.f32 %v1469, %v1509
        %1511 = vmatmul.f32.gmra.mxu0 %v1201
        %v1512 = vpop.f32.mrf.mxu0
        %v1513 = vadd.f32 %v1472, %v1512
        %1514 = vdwg.mxu0
        %1515 = vmatpush.msra.mxu0 %v1286
        %1516 = vmatpush.msra.mxu0 %v1285
        %1517 = vmatpush.msra.mxu0 %v1284
        %1518 = vmatpush.msra.mxu0 %v1283
        %1519 = vmatpush.msra.mxu0 %v1282
        %1520 = vmatpush.msra.mxu0 %v1281
        %1521 = vmatpush.msra.mxu0 %v1280
        %1522 = vmatpush.msra.mxu0 %v1279
        %1523 = vmatpush.msra.mxu0 %v1278
        %1524 = vmatpush.msra.mxu0 %v1277
        %1525 = vmatpush.msra.mxu0 %v1276
        %1526 = vmatpush.msra.mxu0 %v1275
        %1527 = vmatpush.msra.mxu0 %v1274
        %1528 = vmatpush.msra.mxu0 %v1273
        %1529 = vmatpush.msra.mxu0 %v1272
        %1530 = vmatpush.msra.mxu0 %v1271
        %1531 = vmatmul.f32.gmra.mxu0 %v1139
        %v1532 = vpop.f32.mrf.mxu0
        %v1533 = vadd.f32 %v1492, %v1532
        %1534 = vmatmul.f32.gmra.mxu0 %v1148
        %v1535 = vpop.f32.mrf.mxu0
        %v1536 = vadd.f32 %v1495, %v1535
        %1537 = vmatmul.f32.gmra.mxu0 %v1157
        %v1538 = vpop.f32.mrf.mxu0
        %v1539 = vadd.f32 %v1498, %v1538
        %1540 = vmatmul.f32.gmra.mxu0 %v1166
        %v1541 = vpop.f32.mrf.mxu0
        %v1542 = vadd.f32 %v1501, %v1541
        %1543 = vmatmul.f32.gmra.mxu0 %v1175
        %v1544 = vpop.f32.mrf.mxu0
        %v1545 = vadd.f32 %v1504, %v1544
        %1546 = vmatmul.f32.gmra.mxu0 %v1184
        %v1547 = vpop.f32.mrf.mxu0
        %v1548 = vadd.f32 %v1507, %v1547
        %1549 = vmatmul.f32.gmra.mxu0 %v1193
        %v1550 = vpop.f32.mrf.mxu0
        %v1551 = vadd.f32 %v1510, %v1550
        %1552 = vmatmul.f32.gmra.mxu0 %v1202
        %v1553 = vpop.f32.mrf.mxu0
        %v1554 = vadd.f32 %v1513, %v1553
        %1555 = vdwg.mxu0
        %1556 = vmatpush.msra.mxu0 %v1302
        %1557 = vmatpush.msra.mxu0 %v1301
        %1558 = vmatpush.msra.mxu0 %v1300
        %1559 = vmatpush.msra.mxu0 %v1299
        %1560 = vmatpush.msra.mxu0 %v1298
        %1561 = vmatpush.msra.mxu0 %v1297
        %1562 = vmatpush.msra.mxu0 %v1296
        %1563 = vmatpush.msra.mxu0 %v1295
        %1564 = vmatpush.msra.mxu0 %v1294
        %1565 = vmatpush.msra.mxu0 %v1293
        %1566 = vmatpush.msra.mxu0 %v1292
        %1567 = vmatpush.msra.mxu0 %v1291
        %1568 = vmatpush.msra.mxu0 %v1290
        %1569 = vmatpush.msra.mxu0 %v1289
        %1570 = vmatpush.msra.mxu0 %v1288
        %1571 = vmatpush.msra.mxu0 %v1287
        %1572 = vmatmul.f32.gmra.mxu0 %v1140
        %v1573 = vpop.f32.mrf.mxu0
        %v1574 = vadd.f32 %v1533, %v1573
        %1575 = vmatmul.f32.gmra.mxu0 %v1149
        %v1576 = vpop.f32.mrf.mxu0
        %v1577 = vadd.f32 %v1536, %v1576
        %1578 = vmatmul.f32.gmra.mxu0 %v1158
        %v1579 = vpop.f32.mrf.mxu0
        %v1580 = vadd.f32 %v1539, %v1579
        %1581 = vmatmul.f32.gmra.mxu0 %v1167
        %v1582 = vpop.f32.mrf.mxu0
        %v1583 = vadd.f32 %v1542, %v1582
        %1584 = vmatmul.f32.gmra.mxu0 %v1176
        %v1585 = vpop.f32.mrf.mxu0
        %v1586 = vadd.f32 %v1545, %v1585
        %1587 = vmatmul.f32.gmra.mxu0 %v1185
        %v1588 = vpop.f32.mrf.mxu0
        %v1589 = vadd.f32 %v1548, %v1588
        %1590 = vmatmul.f32.gmra.mxu0 %v1194
        %v1591 = vpop.f32.mrf.mxu0
        %v1592 = vadd.f32 %v1551, %v1591
        %1593 = vmatmul.f32.gmra.mxu0 %v1203
        %v1594 = vpop.f32.mrf.mxu0
        %v1595 = vadd.f32 %v1554, %v1594
        %1596 = vdwg.mxu0
        %1597 = vmatpush.msra.mxu0 %v1318
        %1598 = vmatpush.msra.mxu0 %v1317
        %1599 = vmatpush.msra.mxu0 %v1316
        %1600 = vmatpush.msra.mxu0 %v1315
        %1601 = vmatpush.msra.mxu0 %v1314
        %1602 = vmatpush.msra.mxu0 %v1313
        %1603 = vmatpush.msra.mxu0 %v1312
        %1604 = vmatpush.msra.mxu0 %v1311
        %1605 = vmatpush.msra.mxu0 %v1310
        %1606 = vmatpush.msra.mxu0 %v1309
        %1607 = vmatpush.msra.mxu0 %v1308
        %1608 = vmatpush.msra.mxu0 %v1307
        %1609 = vmatpush.msra.mxu0 %v1306
        %1610 = vmatpush.msra.mxu0 %v1305
        %1611 = vmatpush.msra.mxu0 %v1304
        %1612 = vmatpush.msra.mxu0 %v1303
        %1613 = vmatmul.f32.gmra.mxu0 %v1141
        %v1614 = vpop.f32.mrf.mxu0
        %v1615 = vadd.f32 %v1574, %v1614
        %1616 = vmatmul.f32.gmra.mxu0 %v1150
        %v1617 = vpop.f32.mrf.mxu0
        %v1618 = vadd.f32 %v1577, %v1617
        %1619 = vmatmul.f32.gmra.mxu0 %v1159
        %v1620 = vpop.f32.mrf.mxu0
        %v1621 = vadd.f32 %v1580, %v1620
        %1622 = vmatmul.f32.gmra.mxu0 %v1168
        %v1623 = vpop.f32.mrf.mxu0
        %v1624 = vadd.f32 %v1583, %v1623
        %1625 = vmatmul.f32.gmra.mxu0 %v1177
        %v1626 = vpop.f32.mrf.mxu0
        %v1627 = vadd.f32 %v1586, %v1626
        %1628 = vmatmul.f32.gmra.mxu0 %v1186
        %v1629 = vpop.f32.mrf.mxu0
        %v1630 = vadd.f32 %v1589, %v1629
        %1631 = vmatmul.f32.gmra.mxu0 %v1195
        %v1632 = vpop.f32.mrf.mxu0
        %v1633 = vadd.f32 %v1592, %v1632
        %1634 = vmatmul.f32.gmra.mxu0 %v1204
        %v1635 = vpop.f32.mrf.mxu0
        %v1636 = vadd.f32 %v1595, %v1635
        %1637 = vdwg.mxu0
        %1638 = vmatpush.msra.mxu0 %v1334
        %1639 = vmatpush.msra.mxu0 %v1333
        %1640 = vmatpush.msra.mxu0 %v1332
        %1641 = vmatpush.msra.mxu0 %v1331
        %1642 = vmatpush.msra.mxu0 %v1330
        %1643 = vmatpush.msra.mxu0 %v1329
        %1644 = vmatpush.msra.mxu0 %v1328
        %1645 = vmatpush.msra.mxu0 %v1327
        %1646 = vmatpush.msra.mxu0 %v1326
        %1647 = vmatpush.msra.mxu0 %v1325
        %1648 = vmatpush.msra.mxu0 %v1324
        %1649 = vmatpush.msra.mxu0 %v1323
        %1650 = vmatpush.msra.mxu0 %v1322
        %1651 = vmatpush.msra.mxu0 %v1321
        %1652 = vmatpush.msra.mxu0 %v1320
        %1653 = vmatpush.msra.mxu0 %v1319
        %1654 = vmatmul.f32.gmra.mxu0 %v1142
        %v1655 = vpop.f32.mrf.mxu0
        %v1656 = vadd.f32 %v1615, %v1655
        %1657 = vmatmul.f32.gmra.mxu0 %v1151
        %v1658 = vpop.f32.mrf.mxu0
        %v1659 = vadd.f32 %v1618, %v1658
        %1660 = vmatmul.f32.gmra.mxu0 %v1160
        %v1661 = vpop.f32.mrf.mxu0
        %v1662 = vadd.f32 %v1621, %v1661
        %1663 = vmatmul.f32.gmra.mxu0 %v1169
        %v1664 = vpop.f32.mrf.mxu0
        %v1665 = vadd.f32 %v1624, %v1664
        %1666 = vmatmul.f32.gmra.mxu0 %v1178
        %v1667 = vpop.f32.mrf.mxu0
        %v1668 = vadd.f32 %v1627, %v1667
        %1669 = vmatmul.f32.gmra.mxu0 %v1187
        %v1670 = vpop.f32.mrf.mxu0
        %v1671 = vadd.f32 %v1630, %v1670
        %1672 = vmatmul.f32.gmra.mxu0 %v1196
        %v1673 = vpop.f32.mrf.mxu0
        %v1674 = vadd.f32 %v1633, %v1673
        %1675 = vmatmul.f32.gmra.mxu0 %v1205
        %v1676 = vpop.f32.mrf.mxu0
        %v1677 = vadd.f32 %v1636, %v1676
        %1678 = vdwg.mxu0
        %1679 = vmatpush.msra.mxu0 %v1350
        %1680 = vmatpush.msra.mxu0 %v1349
        %1681 = vmatpush.msra.mxu0 %v1348
        %1682 = vmatpush.msra.mxu0 %v1347
        %1683 = vmatpush.msra.mxu0 %v1346
        %1684 = vmatpush.msra.mxu0 %v1345
        %1685 = vmatpush.msra.mxu0 %v1344
        %1686 = vmatpush.msra.mxu0 %v1343
        %1687 = vmatpush.msra.mxu0 %v1342
        %1688 = vmatpush.msra.mxu0 %v1341
        %1689 = vmatpush.msra.mxu0 %v1340
        %1690 = vmatpush.msra.mxu0 %v1339
        %1691 = vmatpush.msra.mxu0 %v1338
        %1692 = vmatpush.msra.mxu0 %v1337
        %1693 = vmatpush.msra.mxu0 %v1336
        %1694 = vmatpush.msra.mxu0 %v1335
        %1695 = vmatmul.f32.gmra.mxu0 %v1143
        %v1696 = vpop.f32.mrf.mxu0
        %v1697 = vadd.f32 %v1656, %v1696
        %1698 = vmatmul.f32.gmra.mxu0 %v1152
        %v1699 = vpop.f32.mrf.mxu0
        %v1700 = vadd.f32 %v1659, %v1699
        %1701 = vmatmul.f32.gmra.mxu0 %v1161
        %v1702 = vpop.f32.mrf.mxu0
        %v1703 = vadd.f32 %v1662, %v1702
        %1704 = vmatmul.f32.gmra.mxu0 %v1170
        %v1705 = vpop.f32.mrf.mxu0
        %v1706 = vadd.f32 %v1665, %v1705
        %1707 = vmatmul.f32.gmra.mxu0 %v1179
        %v1708 = vpop.f32.mrf.mxu0
        %v1709 = vadd.f32 %v1668, %v1708
        %1710 = vmatmul.f32.gmra.mxu0 %v1188
        %v1711 = vpop.f32.mrf.mxu0
        %v1712 = vadd.f32 %v1671, %v1711
        %1713 = vmatmul.f32.gmra.mxu0 %v1197
        %v1714 = vpop.f32.mrf.mxu0
        %v1715 = vadd.f32 %v1674, %v1714
        %1716 = vmatmul.f32.gmra.mxu0 %v1206
        %v1717 = vpop.f32.mrf.mxu0
        %v1718 = vadd.f32 %v1677, %v1717
        %1719 = vdwg.mxu0
        %v1720 = vld [vmem:[%s5] sm:$0x1]
        %v1722 = vperm.slane %v1720, 0
        %v1724 = vmul.f32 %v1697, %v1722
        %v1725 = vmul.f32 %v1700, %v1722
        %v1726 = vmul.f32 %v1703, %v1722
        %v1727 = vmul.f32 %v1706, %v1722
        %v1728 = vmul.f32 %v1709, %v1722
        %v1729 = vmul.f32 %v1712, %v1722
        %v1730 = vmul.f32 %v1715, %v1722
        %v1731 = vmul.f32 %v1718, %v1722
        %v1732 = vld [vmem:[%s6] sm:$0x1]
        %v1734 = vperm.slane %v1732, 0
        %v1736 = vadd.f32 %v1724, %v1734
        %v1737 = vadd.f32 %v1725, %v1734
        %v1738 = vadd.f32 %v1726, %v1734
        %v1739 = vadd.f32 %v1727, %v1734
        %v1740 = vadd.f32 %v1728, %v1734
        %v1741 = vadd.f32 %v1729, %v1734
        %v1742 = vadd.f32 %v1730, %v1734
        %v1743 = vadd.f32 %v1731, %v1734
        %v1744 = vmax.f32 %v1736, 0.0
        %v1745 = vmax.f32 %v1737, 0.0
        %v1746 = vmax.f32 %v1738, 0.0
        %v1747 = vmax.f32 %v1739, 0.0
        %v1748 = vmax.f32 %v1740, 0.0
        %v1749 = vmax.f32 %v1741, 0.0
        %v1750 = vmax.f32 %v1742, 0.0
        %v1751 = vmax.f32 %v1743, 0.0
        %1752 = vst [vmem:[%s295] sm:$0xff] %v1744
        %1753 = vst [vmem:[%s295 + $0x8] sm:$0xff] %v1745
        %1754 = vst [vmem:[%s295 + $0x10] sm:$0xff] %v1746
        %1755 = vst [vmem:[%s295 + $0x18] sm:$0xff] %v1747
        %1756 = vst [vmem:[%s295 + $0x20] sm:$0xff] %v1748
        %1757 = vst [vmem:[%s295 + $0x28] sm:$0xff] %v1749
        %1758 = vst [vmem:[%s295 + $0x30] sm:$0xff] %v1750
        %1759 = vst [vmem:[%s295 + $0x38] sm:$0xff] %v1751
        %p1760 = scmp.lt.s32.totalorder %s19, 1
        %s1761 = scalar_select %p1760, %s19, 1
        %s1762 = smul.addr %s1761, 8
        %s1763 = smul.addr %s1762, 8
        %s1764 = scalar_lea.vmem %s7, %s1763
        // Predicated region
        $region53: #{down_forward.1} parent=47 // pred_check
          %p1765 = pneg %p189
        $region54: #{down_forward.1} parent=47 // pred_check_branch
          %1767 = sbr.rel (%p1765) target = $region56
        $region55: #{down_forward.1} parent=47 // pred_region
          _
        $region56: #{down_forward.1} parent=47 // pred_fallthru
          _
      $region48: #{down_forward.1} parent=5 // pred_fallthru
        _
      %p1768 = scmp.le.s32.totalorder 2, %s14
      // Predicated region
      $region57: #{down_forward.1} parent=5 // pred_check
        %p1769 = pneg %p1768
      $region58: #{down_forward.1} parent=5 // pred_check_branch
        %1771 = sbr.rel (%p1769) target = $region60
      $region59: #{down_forward.1} parent=5 // pred_region
        %s1772 = ssub.s32 %s14, 2
        // Predicated region
        $region61: #{down_forward.1} parent=59 // pred_check
          %p1773 = pneg %p195
        $region62: #{down_forward.1} parent=59 // pred_check_branch
          %1775 = sbr.rel (%p1773) target = $region64
        $region63: #{down_forward.1} parent=59 // pred_region
          %p1776 = scmp.lt.s32.totalorder %s20, 1
          %s1777 = scalar_select %p1776, %s20, 1
          %s1778 = smul.addr %s1777, 8
          %s1779 = smul.addr %s1778, 8
          %s1780 = scalar_lea.vmem %s7, %s1779
        $region64: #{down_forward.1} parent=59 // pred_fallthru
          _
      $region60: #{down_forward.1} parent=5 // pred_fallthru
        _
    $region6: #{down_forward.1} parent=1 // loop_footer
      %s18 = sadd.s32 1, %s14
    $region7: #{down_forward.1} parent=1 // loop_footer_branch
      %13 = sbr.rel target = $region3
    $region8: #{down_forward.1} parent=1 // loop_exit
      _
    %1781 = vsyncpa [#allocation7], 1
    %s1782 = scalar_lea.sflag [#allocation7], 1
    %1783 = vsyncpa %s1782, 1

</llo_original>
